<compile_context>
chip_gen: v6e
topology: v6e:2x2x1
jax: 0.10.0
libtpu: 0.0.40
codegen_flags: <defaults>
</compile_context>

<pallas_src>
import functools

import jax
import jax.numpy as jnp
from jax import lax
from jax.experimental import pallas as pl
from jax.experimental.pallas import tpu as pltpu

GROWTH = 32
BN_SIZE = 4
BOTTLENECK = BN_SIZE * GROWTH          # 128
NUM_INIT = 64
BLOCK_CONFIG = (6, 12, 48, 32)         # densenet201
BN_EPS = 1e-5

ACT_DTYPE = jnp.bfloat16               # activation storage dtype
WGT_DTYPE = jnp.bfloat16               # MXU weight dtype (f32 accumulation)
VMEM_LIMIT = 32 * 1024 * 1024          # explicit scoped-VMEM budget


def _round_up(x, m):
    return (x + m - 1) // m * m


# --------------------------------------------------------------------------
# Pallas kernel 1: fused matmul with per-channel prologue/epilogue affine+ReLU
#   out = epi( pro(a[:, :K]) @ b )
#   pro(a)  = relu?(a * ps + pt)   (per input  channel, e.g. BN before conv)
#   epi(y)  = relu?(y * es + et)   (per output channel, e.g. BN/bias after)
# --------------------------------------------------------------------------
def _fused_matmul_kernel(a_ref, b_ref, ps_ref, pt_ref, es_ref, et_ref,
                         o_ref, acc_ref, *, pro_relu, epi_relu):
    k = pl.program_id(2)

    @pl.when(k == 0)
    def _():
        acc_ref[...] = jnp.zeros_like(acc_ref)

    a = a_ref[...] * ps_ref[...] + pt_ref[...]          # f32 prologue affine
    if pro_relu:
        a = jnp.maximum(a, 0.0)
    acc_ref[...] += jnp.dot(a.astype(b_ref.dtype), b_ref[...],
                            preferred_element_type=jnp.float32)

    @pl.when(k == pl.num_programs(2) - 1)               # store only on last K step
    def _():
        y = acc_ref[...] * es_ref[...] + et_ref[...]
        if epi_relu:
            y = jnp.maximum(y, 0.0)
        o_ref[...] = y.astype(o_ref.dtype)


def fused_matmul(a, b, ps, pt, es, et, *, pro_relu, epi_relu, out_dtype):
    """a: (M, Ka) activations, b: (K, N) bf16 weights with K <= Ka.

    Only the first K columns of `a` are streamed (used by the dense blocks to
    skip not-yet-written channels).  ps/pt: (1, K); es/et: (1, N)."""
    M, Ka = a.shape
    K, N = b.shape
    assert K <= Ka and ps.shape == (1, K) and pt.shape == (1, K)
    assert es.shape == (1, N) and et.shape == (1, N)

    tm = M if M <= 256 else 256
    assert M % tm == 0, (M, tm)
    tn = N if N <= 512 else (512 if N % 512 == 0 else N)
    assert N % tn == 0, (N, tn)
    if K <= 2048:
        tk = K
        assert K == Ka or K % 128 == 0, (K, Ka)
    else:                                   # only fc1 (K = 30720) hits this
        cap = max(128, min(K, (3 << 20) // (2 * tn)) // 128 * 128)
        tk = 128
        for t in range(cap, 127, -128):
            if K % t == 0:
                tk = t
                break
    assert K % tk == 0, (K, tk)

    grid = (M // tm, N // tn, K // tk)
    return pl.pallas_call(
        functools.partial(_fused_matmul_kernel, pro_relu=pro_relu,
                          epi_relu=epi_relu),
        out_shape=jax.ShapeDtypeStruct((M, N), out_dtype),
        grid_spec=pltpu.PrefetchScalarGridSpec(
            num_scalar_prefetch=0,
            grid=grid,
            in_specs=[
                pl.BlockSpec((tm, tk), lambda i, j, k: (i, k)),   # activations
                pl.BlockSpec((tk, tn), lambda i, j, k: (k, j)),   # weights
                pl.BlockSpec((1, tk), lambda i, j, k: (0, k)),    # prologue scale
                pl.BlockSpec((1, tk), lambda i, j, k: (0, k)),    # prologue shift
                pl.BlockSpec((1, tn), lambda i, j, k: (0, j)),    # epilogue scale
                pl.BlockSpec((1, tn), lambda i, j, k: (0, j)),    # epilogue shift
            ],
            out_specs=pl.BlockSpec((tm, tn), lambda i, j, k: (i, j)),
            scratch_shapes=[pltpu.VMEM((tm, tn), jnp.float32)]),
        compiler_params=pltpu.CompilerParams(
            dimension_semantics=("parallel", "parallel", "arbitrary"),
            vmem_limit_bytes=VMEM_LIMIT),
    )(a, b, ps, pt, es, et)


# --------------------------------------------------------------------------
# Pallas kernel 2: a whole DenseLayer in one kernel (blocks with W % 8 == 0)
#   norm1+ReLU -> 1x1 conv -> norm2+ReLU -> 3x3 conv (stride 1, pad 1)
# The 1x1 part is tiled over M; the bottleneck activation is kept in VMEM
# (flat scratch + spatially padded scratch) and the 3x3 conv runs as 9
# accumulating MXU taps on the last grid step.
# --------------------------------------------------------------------------
def _dense_layer_kernel(feats_ref, w1_ref, ps_ref, pt_ref, es_ref, et_ref,
                        w2_ref, o_ref, zs_ref, zp_ref, *, B, H, W, tm):
    i = pl.program_id(0)
    C = BOTTLENECK
    P = 16                                   # tile-aligned interior col offset

    # ---- 1x1 conv on this M tile (norm1+ReLU prologue, norm2+ReLU epilogue)
    a = feats_ref[...] * ps_ref[...] + pt_ref[...]          # f32
    a = jnp.maximum(a, 0.0)
    z = jnp.dot(a.astype(w1_ref.dtype), w1_ref[...],
                preferred_element_type=jnp.float32)          # (tm, C) f32
    z = jnp.maximum(z * es_ref[...] + et_ref[...], 0.0)
    zs_ref[pl.ds(pl.multiple_of(i * tm, tm), tm), :] = z.astype(zs_ref.dtype)

    # ---- last M tile: 3x3 conv over the whole feature map (9 MXU taps)
    @pl.when(i == pl.num_programs(0) - 1)
    def _():
        # zero only the halo the taps will read (all aligned offsets/extents)
        zp_ref[:, :, P - 8:P, :] = jnp.zeros((B, H + 2, 8, C), zp_ref.dtype)
        zp_ref[:, :, P + W:P + W + 8, :] = jnp.zeros((B, H + 2, 8, C),
                                                     zp_ref.dtype)
        zp_ref[:, 0:1, P:P + W, :] = jnp.zeros((B, 1, W, C), zp_ref.dtype)
        zp_ref[:, H + 1:H + 2, P:P + W, :] = jnp.zeros((B, 1, W, C),
                                                       zp_ref.dtype)
        # scatter the bottleneck activation into the padded scratch interior
        for b in range(B):
            for h in range(H):
                r = (b * H + h) * W
                zp_ref[b, h + 1, P:P + W, :] = (
                    zs_ref[r:r + W, :].astype(zp_ref.dtype))
        # 9 accumulating taps, tap index = kh*3 + kw (rows ordered kh,kw,cin)
        acc = None
        for kh in range(3):
            for kw in range(3):
                t = zp_ref[:, kh:kh + H, P - 1 + kw:P - 1 + kw + W, :]
                t = t.reshape(B * H * W, C).astype(w2_ref.dtype)
                d = jnp.dot(t, w2_ref[kh * 3 + kw],
                            preferred_element_type=jnp.float32)
                acc = d if acc is None else acc + d
        o_ref[...] = acc.astype(o_ref.dtype)


def dense_layer_fused(feats, w1, ps1, pt1, es2, et2, w2, *, B, H, W):
    """feats: (M, Ka) with M = B*H*W; only the first K = w1.shape[0] columns
    are streamed.  Returns the 32 new channels, shape (M, GROWTH)."""
    M, Ka = feats.shape
    K = w1.shape[0]
    assert M == B * H * W and W % 8 == 0
    assert K <= Ka and (K == Ka or K % 128 == 0)
    assert ps1.shape == (1, K) and pt1.shape == (1, K)
    assert es2.shape == (1, BOTTLENECK) and et2.shape == (1, BOTTLENECK)
    tm = min(M, 256)
    assert M % tm == 0, (M, tm)
    # f32 scratch when W is not a multiple of the bf16 packing (keeps the
    # interior scatter stores fully tile-aligned); bf16 otherwise.
    zp_dtype = ACT_DTYPE if W % 16 == 0 else jnp.float32

    return pl.pallas_call(
        functools.partial(_dense_layer_kernel, B=B, H=H, W=W, tm=tm),
        out_shape=jax.ShapeDtypeStruct((M, GROWTH), ACT_DTYPE),
        grid_spec=pltpu.PrefetchScalarGridSpec(
            num_scalar_prefetch=0,
            grid=(M // tm,),
            in_specs=[
                pl.BlockSpec((tm, K), lambda i: (i, 0)),            # feats
                pl.BlockSpec((K, BOTTLENECK), lambda i: (0, 0)),    # w1 (1x1)
                pl.BlockSpec((1, K), lambda i: (0, 0)),             # norm1 scale
                pl.BlockSpec((1, K), lambda i: (0, 0)),             # norm1 shift
                pl.BlockSpec((1, BOTTLENECK), lambda i: (0, 0)),    # norm2 scale
                pl.BlockSpec((1, BOTTLENECK), lambda i: (0, 0)),    # norm2 shift
                pl.BlockSpec((9, BOTTLENECK, GROWTH),
                             lambda i: (0, 0, 0)),                  # w2 (3x3)
            ],
            out_specs=pl.BlockSpec((M, GROWTH), lambda i: (0, 0)),
            scratch_shapes=[
                pltpu.VMEM((M, BOTTLENECK), ACT_DTYPE),             # flat z
                pltpu.VMEM((B, H + 2, W + 32, BOTTLENECK), zp_dtype),  # padded z
            ]),
        compiler_params=pltpu.CompilerParams(
            dimension_semantics=("arbitrary",),
            vmem_limit_bytes=VMEM_LIMIT),
    )(feats, w1, ps1, pt1, es2, et2, w2)


# --------------------------------------------------------------------------
# Small helpers
# --------------------------------------------------------------------------
def _bn_scale_shift(bn, eps=BN_EPS):
    gamma, beta, mean, var = bn
    s = gamma / jnp.sqrt(var + eps)
    return s, beta - mean * s


def _im2col(x, k, stride, pad):
    """x: (B,H,W,C) -> (B,Ho,Wo,k*k*C), column order (kh, kw, Cin)."""
    B, H, W, C = x.shape
    xp = jnp.pad(x, ((0, 0), (pad, pad), (pad, pad), (0, 0)))
    Ho = (H + 2 * pad - k) // stride + 1
    Wo = (W + 2 * pad - k) // stride + 1
    cols = []
    for dh in range(k):
        for dw in range(k):
            cols.append(xp[:, dh:dh + stride * Ho:stride,
                           dw:dw + stride * Wo:stride, :])
    return jnp.concatenate(cols, axis=-1), Ho, Wo


def _ones(n):
    return jnp.ones((1, n), jnp.float32)


def _zeros(n):
    return jnp.zeros((1, n), jnp.float32)


# --------------------------------------------------------------------------
# Jitted forward stages
# --------------------------------------------------------------------------
@jax.jit
def stem_fn(x_nchw, w0, es0, et0):
    """conv0(7x7,s2,p3) + norm0(BN+ReLU) epilogue + MaxPool(3,2,1)."""
    x = jnp.transpose(x_nchw, (0, 2, 3, 1)).astype(ACT_DTYPE)   # NCHW -> NHWC
    patches, Ho, Wo = _im2col(x, 7, 2, 3)                       # Cin=1 -> K=49
    B = x.shape[0]
    K = patches.shape[-1]
    y = fused_matmul(patches.reshape(B * Ho * Wo, K), w0,
                     _ones(K), _zeros(K), es0, et0,
                     pro_relu=False, epi_relu=True, out_dtype=ACT_DTYPE)
    y = y.reshape(B, Ho, Wo, -1)
    # MaxPool2d(kernel=3, stride=2, padding=1) kept as window-reduce glue.
    return lax.reduce_window(y, jnp.array(-jnp.inf, y.dtype), lax.max,
                             (1, 3, 3, 1), (1, 2, 2, 1),
                             ((0, 0), (1, 1), (1, 1), (0, 0)))


@functools.partial(jax.jit, static_argnames=("B", "H", "W"), donate_argnums=(0,))
def dense_layer_step(feats, c_in, w1, ps1, pt1, es2, et2, w2, *, B, H, W):
    """One DenseLayer, then append the 32 new channels in place."""
    if W % 8 == 0:
        nf = dense_layer_fused(feats, w1, ps1, pt1, es2, et2, w2,
                               B=B, H=H, W=W)
    else:
        # tiny 4x4 spatial case: 1x1 conv + in-jit im2col fallback
        z = fused_matmul(feats, w1, ps1, pt1, es2, et2,
                         pro_relu=True, epi_relu=True, out_dtype=ACT_DTYPE)
        patches, _, _ = _im2col(z.reshape(B, H, W, BOTTLENECK), 3, 1, 1)
        K9 = 9 * BOTTLENECK
        nf = fused_matmul(patches.reshape(B * H * W, K9),
                          w2.reshape(K9, GROWTH),
                          _ones(K9), _zeros(K9), _ones(GROWTH), _zeros(GROWTH),
                          pro_relu=False, epi_relu=False, out_dtype=ACT_DTYPE)
    # donated feats => XLA performs this update in place
    return lax.dynamic_update_slice(feats, nf, (0, c_in))


@functools.partial(jax.jit, static_argnames=("B", "H", "W"))
def transition_step(feats, ps, pt, w, *, B, H, W):
    """norm(BN+ReLU) prologue -> 1x1 conv -> AvgPool2d(2,2)."""
    N = w.shape[1]
    y = fused_matmul(feats, w, ps, pt, _ones(N), _zeros(N),
                     pro_relu=True, epi_relu=False, out_dtype=ACT_DTYPE)
    y = y.reshape(B, H // 2, 2, W // 2, 2, N).mean(axis=(2, 4))
    return y.reshape(B * (H // 2) * (W // 2), N)


@jax.jit
def classifier_fn(feats, fc):
    """norm5(+ReLU) fused into fc1's prologue; BN1d folded into fc2/fc3."""
    B = feats.shape[0] // 16
    # PyTorch flatten order: (B, C, H, W) -> (B, C*4*4)
    x = feats.reshape(B, 4, 4, -1).transpose(0, 3, 1, 2).reshape(B, -1)
    h = fused_matmul(x, fc["w1"], fc["ps1"], fc["pt1"], _ones(1024), fc["b1"],
                     pro_relu=True, epi_relu=True, out_dtype=ACT_DTYPE)
    # TODO(synk): Dropout(p=0.33) layers are inference-mode identity.
    h = fused_matmul(h, fc["w2"], _ones(1024), _zeros(1024), _ones(64), fc["b2"],
                     pro_relu=False, epi_relu=True, out_dtype=ACT_DTYPE)
    n_out = fc["w3"].shape[1]
    return fused_matmul(h, fc["w3"], _ones(64), _zeros(64), _ones(n_out),
                        fc["b3"], pro_relu=False, epi_relu=False,
                        out_dtype=jnp.float32)


# --------------------------------------------------------------------------
# Parameters (synthetic, PyTorch-layout) + one-time fold/pad/cast preparation
# --------------------------------------------------------------------------
def init_params(key, n_classes):
    cnt = [0]

    def nkey():
        cnt[0] += 1
        return jax.random.fold_in(key, cnt[0])

    def he(shape, fan_in):
        return jax.random.normal(nkey(), shape, jnp.float32) * jnp.sqrt(2.0 / fan_in)

    def bn(c):   # (gamma, beta, running_mean, running_var) at PyTorch init
        return (jnp.ones((c,), jnp.float32), jnp.zeros((c,), jnp.float32),
                jnp.zeros((c,), jnp.float32), jnp.ones((c,), jnp.float32))

    params = {"conv0": he((7 * 7 * 1, NUM_INIT), 7 * 7 * 1),   # rows: (kh,kw,cin)
              "norm0": bn(NUM_INIT)}
    blocks, trans = [], []
    c = NUM_INIT
    for bi, nl in enumerate(BLOCK_CONFIG):
        layers = []
        for l in range(nl):
            c_in = c + l * GROWTH
            layers.append(dict(
                bn1=bn(c_in),
                w1=he((c_in, BOTTLENECK), c_in),                      # 1x1
                bn2=bn(BOTTLENECK),
                w2=he((9 * BOTTLENECK, GROWTH), 9 * BOTTLENECK),      # 3x3 (kh,kw,cin)
            ))
        blocks.append(layers)
        c += nl * GROWTH
        if bi < len(BLOCK_CONFIG) - 1:
            trans.append(dict(norm=bn(c), w=he((c, c // 2), c)))
            c //= 2
    params["blocks"], params["trans"] = blocks, trans
    params["norm5"] = bn(c)                                           # c == 1920

    feat_dim = c * 4 * 4                                              # 30720
    params["fc1_w"] = he((feat_dim, 1024), feat_dim)
    params["fc1_b"] = jnp.zeros((1024,), jnp.float32)
    params["bn_fc1"] = bn(1024)
    params["fc2_w"] = he((1024, 64), 1024)
    params["fc2_b"] = jnp.zeros((64,), jnp.float32)
    params["bn_fc2"] = bn(64)
    params["fc3_w"] = he((64, n_classes), 64)
    params["fc3_b"] = jnp.zeros((n_classes,), jnp.float32)
    return params


def prepare_params(params):
    """Fold / pad / cast once: BN -> (scale, shift) fused as matmul prologue or
    epilogue, classifier BN1d folded into the next Linear, 1x1 weights
    zero-padded along K to a 256 multiple, weights cast to bf16."""
    prep = {"trans": []}
    s0, t0 = _bn_scale_shift(params["norm0"])
    prep["stem"] = dict(w=params["conv0"].astype(WGT_DTYPE),
                        es=s0.reshape(1, -1), et=t0.reshape(1, -1))

    pblocks = []
    c = NUM_INIT
    for bi, layers in enumerate(params["blocks"]):
        cf = c + len(layers) * GROWTH
        plys = []
        for l, p in enumerate(layers):
            c_in = c + l * GROWTH
            k_eff = min(_round_up(c_in, 256), cf)       # valid-K, 128-aligned
            pad = k_eff - c_in
            s1, t1 = _bn_scale_shift(p["bn1"])
            s2, t2 = _bn_scale_shift(p["bn2"])
            plys.append(dict(
                c_in=c_in,
                w1=jnp.pad(p["w1"], ((0, pad), (0, 0))).astype(WGT_DTYPE),
                ps1=jnp.pad(s1, (0, pad)).reshape(1, -1),
                pt1=jnp.pad(t1, (0, pad)).reshape(1, -1),
                es2=s2.reshape(1, -1), et2=t2.reshape(1, -1),
                w2=p["w2"].reshape(9, BOTTLENECK, GROWTH).astype(WGT_DTYPE),
            ))
        pblocks.append(plys)
        c = cf
        if bi < len(params["blocks"]) - 1:
            st, tt = _bn_scale_shift(params["trans"][bi]["norm"])
            prep["trans"].append(dict(ps=st.reshape(1, -1), pt=tt.reshape(1, -1),
                                      w=params["trans"][bi]["w"].astype(WGT_DTYPE)))
            c //= 2
    prep["blocks"] = pblocks

    # classifier: norm5(+ReLU) expanded to the NCHW flatten order (c*16+h*4+w)
    s5, t5 = _bn_scale_shift(params["norm5"])
    fc = dict(ps1=jnp.repeat(s5, 16).reshape(1, -1),
              pt1=jnp.repeat(t5, 16).reshape(1, -1),
              w1=params["fc1_w"].astype(WGT_DTYPE),
              b1=params["fc1_b"].reshape(1, -1))
    sa, ta = _bn_scale_shift(params["bn_fc1"])          # BN1d(1024) -> fc2
    fc["w2"] = (sa[:, None] * params["fc2_w"]).astype(WGT_DTYPE)
    fc["b2"] = (params["fc2_b"] + ta @ params["fc2_w"]).reshape(1, -1)
    sb, tb = _bn_scale_shift(params["bn_fc2"])          # BN1d(64)   -> fc3
    fc["w3"] = (sb[:, None] * params["fc3_w"]).astype(WGT_DTYPE)
    fc["b3"] = (params["fc3_b"] + tb @ params["fc3_w"]).reshape(1, -1)
    prep["fc"] = fc
    return prep


# --------------------------------------------------------------------------
# Full forward pass (Python orchestration around the jitted stages)
# --------------------------------------------------------------------------
def densenet201_forward(x_nchw, prep):
    B = int(x_nchw.shape[0])
    x = stem_fn(x_nchw, prep["stem"]["w"], prep["stem"]["es"], prep["stem"]["et"])
    H, W = int(x.shape[1]), int(x.shape[2])
    x2d = x.reshape(B * H * W, NUM_INIT)

    c = NUM_INIT
    feats = None
    for bi, layers in enumerate(prep["blocks"]):
        cf = c + len(layers) * GROWTH
        feats = jnp.pad(x2d, ((0, 0), (0, cf - c)))     # zero-init growth area
        for p in layers:
            feats = dense_layer_step(feats, p["c_in"], p["w1"], p["ps1"],
                                     p["pt1"], p["es2"], p["et2"], p["w2"],
                                     B=B, H=H, W=W)
        c = cf
        if bi < len(prep["blocks"]) - 1:
            t = prep["trans"][bi]
            x2d = transition_step(feats, t["ps"], t["pt"], t["w"], B=B, H=H, W=W)
            H //= 2
            W //= 2
            c //= 2
    return classifier_fn(feats, prep["fc"])


if __name__ == "__main__":
    n_classes = 5
    key = jax.random.PRNGKey(0)
    params = init_params(key, n_classes)
    prep = prepare_params(params)
    # 1-channel 128x128 input => forward_features gives (B, 1920, 4, 4),
    # matching the classifier's 1920*4*4 flatten.
    x = jax.random.normal(jax.random.fold_in(key, 9999), (2, 1, 128, 128),
                          jnp.float32)
    out = densenet201_forward(x, prep)
    out = jax.block_until_ready(out)
    assert out.shape == (2, n_classes), out.shape
    print("KERNEL_OK")
</pallas_src>

<mosaic_0001>
module attributes {stable_mosaic.version = 11 : i64} {
  func.func @_fused_matmul_kernel(%arg0: i32, %arg1: i32, %arg2: i32, %arg3: memref<256x49xbf16, #tpu.memory_space<vmem>>, %arg4: memref<49x64xbf16, #tpu.memory_space<vmem>>, %arg5: memref<1x49xf32, #tpu.memory_space<vmem>>, %arg6: memref<1x49xf32, #tpu.memory_space<vmem>>, %arg7: memref<1x64xf32, #tpu.memory_space<vmem>>, %arg8: memref<1x64xf32, #tpu.memory_space<vmem>>, %arg9: memref<256x64xbf16, #tpu.memory_space<vmem>>, %arg10: memref<256x64xf32, #tpu.memory_space<vmem>>) attributes {dimension_semantics = [#tpu.dimension_semantics<parallel>, #tpu.dimension_semantics<parallel>, #tpu.dimension_semantics<arbitrary>], iteration_bounds = array<i64: 32, 1, 1>, scalar_prefetch = 0 : i64, scratch_operands = 1 : i64, tpu.core_type = #tpu.core_type<tc>, window_params = [{transform_indices = @transform_0, window_bounds = array<i64: 256, 49>}, {transform_indices = @transform_1, window_bounds = array<i64: 49, 64>}, {transform_indices = @transform_2, window_bounds = array<i64: 1, 49>}, {transform_indices = @transform_3, window_bounds = array<i64: 1, 49>}, {transform_indices = @transform_4, window_bounds = array<i64: 1, 64>}, {transform_indices = @transform_5, window_bounds = array<i64: 1, 64>}, {transform_indices = @transform_6, window_bounds = array<i64: 256, 64>}]} {
    %c0_i32 = arith.constant 0 : i32
    %0 = arith.cmpi eq, %arg2, %c0_i32 : i32
    %1 = arith.extui %0 : i1 to i32
    %c0_i32_0 = arith.constant 0 : i32
    %2 = arith.cmpi ne, %1, %c0_i32_0 : i32
    scf.if %2 {
      %cst_14 = arith.constant 0.000000e+00 : f32
      %20 = vector.broadcast %cst_14 : f32 to vector<256x64xf32>
      %c0_15 = arith.constant 0 : index
      %c0_16 = arith.constant 0 : index
      %21 = vector.load %arg10[%c0_15, %c0_16] : memref<256x64xf32, #tpu.memory_space<vmem>>, vector<256x64xf32>
      tpu.vector_store %arg10[%c0_15, %c0_16], %20 {strides = array<i32>} : memref<256x64xf32, #tpu.memory_space<vmem>>, vector<256x64xf32>,
    } else {
    }
    %c0 = arith.constant 0 : index
    %c0_1 = arith.constant 0 : index
    %3 = vector.load %arg3[%c0, %c0_1] : memref<256x49xbf16, #tpu.memory_space<vmem>>, vector<256x49xbf16>
    %c0_2 = arith.constant 0 : index
    %c0_3 = arith.constant 0 : index
    %4 = vector.load %arg5[%c0_2, %c0_3] : memref<1x49xf32, #tpu.memory_space<vmem>>, vector<1x49xf32>
    %5 = arith.extf %3 : vector<256x49xbf16> to vector<256x49xf32>
    %6 = vector.broadcast %4 : vector<1x49xf32> to vector<256x49xf32>
    %7 = arith.mulf %5, %6 : vector<256x49xf32>
    %c0_4 = arith.constant 0 : index
    %c0_5 = arith.constant 0 : index
    %8 = vector.load %arg6[%c0_4, %c0_5] : memref<1x49xf32, #tpu.memory_space<vmem>>, vector<1x49xf32>
    %9 = vector.broadcast %8 : vector<1x49xf32> to vector<256x49xf32>
    %10 = arith.addf %7, %9 : vector<256x49xf32>
    %c0_6 = arith.constant 0 : index
    %c0_7 = arith.constant 0 : index
    %11 = vector.load %arg10[%c0_6, %c0_7] : memref<256x64xf32, #tpu.memory_space<vmem>>, vector<256x64xf32>
    %12 = arith.truncf %10 : vector<256x49xf32> to vector<256x49xbf16>
    %c0_8 = arith.constant 0 : index
    %c0_9 = arith.constant 0 : index
    %13 = vector.load %arg4[%c0_8, %c0_9] : memref<49x64xbf16, #tpu.memory_space<vmem>>, vector<49x64xbf16>
    %cst = arith.constant dense<0.000000e+00> : vector<256x64xf32>
    %14 = tpu.matmul %12, %13, %cst {dimension_numbers = #tpu.dot_dimension_numbers<[1], [0], [0], [1], [0, 0, 1, 1], [], []>} : vector<256x49xbf16>, vector<49x64xbf16>, vector<256x64xf32> -> vector<256x64xf32>
    %15 = arith.addf %11, %14 : vector<256x64xf32>
    %c0_10 = arith.constant 0 : index
    %c0_11 = arith.constant 0 : index
    %16 = vector.load %arg10[%c0_10, %c0_11] : memref<256x64xf32, #tpu.memory_space<vmem>>, vector<256x64xf32>
    tpu.vector_store %arg10[%c0_10, %c0_11], %15 {strides = array<i32>} : memref<256x64xf32, #tpu.memory_space<vmem>>, vector<256x64xf32>,
    %c0_i32_12 = arith.constant 0 : i32
    %17 = arith.cmpi eq, %arg2, %c0_i32_12 : i32
    %18 = arith.extui %17 : i1 to i32
    %c0_i32_13 = arith.constant 0 : i32
    %19 = arith.cmpi ne, %18, %c0_i32_13 : i32
    scf.if %19 {
      %c0_14 = arith.constant 0 : index
      %c0_15 = arith.constant 0 : index
      %20 = vector.load %arg10[%c0_14, %c0_15] : memref<256x64xf32, #tpu.memory_space<vmem>>, vector<256x64xf32>
      %c0_16 = arith.constant 0 : index
      %c0_17 = arith.constant 0 : index
      %21 = vector.load %arg7[%c0_16, %c0_17] : memref<1x64xf32, #tpu.memory_space<vmem>>, vector<1x64xf32>
      %22 = vector.broadcast %21 : vector<1x64xf32> to vector<256x64xf32>
      %23 = arith.mulf %20, %22 : vector<256x64xf32>
      %c0_18 = arith.constant 0 : index
      %c0_19 = arith.constant 0 : index
      %24 = vector.load %arg8[%c0_18, %c0_19] : memref<1x64xf32, #tpu.memory_space<vmem>>, vector<1x64xf32>
      %25 = vector.broadcast %24 : vector<1x64xf32> to vector<256x64xf32>
      %26 = arith.addf %23, %25 : vector<256x64xf32>
      %cst_20 = arith.constant 0.000000e+00 : f32
      %27 = vector.broadcast %cst_20 : f32 to vector<256x64xf32>
      %28 = arith.maximumf %26, %27 : vector<256x64xf32>
      %29 = arith.truncf %28 : vector<256x64xf32> to vector<256x64xbf16>
      %c0_21 = arith.constant 0 : index
      %c0_22 = arith.constant 0 : index
      %30 = vector.load %arg9[%c0_21, %c0_22] : memref<256x64xbf16, #tpu.memory_space<vmem>>, vector<256x64xbf16>
      tpu.vector_store %arg9[%c0_21, %c0_22], %29 {strides = array<i32>} : memref<256x64xbf16, #tpu.memory_space<vmem>>, vector<256x64xbf16>,
    } else {
    }
    return
  }
  func.func @transform_0(%arg0: i32, %arg1: i32, %arg2: i32) -> (i32, i32) {
    %c0_i32 = arith.constant 0 : i32
    return %arg0, %arg2 : i32, i32
  }
  func.func @transform_1(%arg0: i32, %arg1: i32, %arg2: i32) -> (i32, i32) {
    %c0_i32 = arith.constant 0 : i32
    return %arg2, %arg1 : i32, i32
  }
  func.func @transform_2(%arg0: i32, %arg1: i32, %arg2: i32) -> (i32, i32) {
    %c0_i32 = arith.constant 0 : i32
    %c0_i32_0 = arith.constant 0 : i32
    return %c0_i32, %arg2 : i32, i32
  }
  func.func @transform_3(%arg0: i32, %arg1: i32, %arg2: i32) -> (i32, i32) {
    %c0_i32 = arith.constant 0 : i32
    %c0_i32_0 = arith.constant 0 : i32
    return %c0_i32, %arg2 : i32, i32
  }
  func.func @transform_4(%arg0: i32, %arg1: i32, %arg2: i32) -> (i32, i32) {
    %c0_i32 = arith.constant 0 : i32
    %c0_i32_0 = arith.constant 0 : i32
    return %c0_i32, %arg1 : i32, i32
  }
  func.func @transform_5(%arg0: i32, %arg1: i32, %arg2: i32) -> (i32, i32) {
    %c0_i32 = arith.constant 0 : i32
    %c0_i32_0 = arith.constant 0 : i32
    return %c0_i32, %arg1 : i32, i32
  }
  func.func @transform_6(%arg0: i32, %arg1: i32, %arg2: i32) -> (i32, i32) {
    %c0_i32 = arith.constant 0 : i32
    return %arg0, %arg1 : i32, i32
  }
}

</mosaic_0001>

<llo_original>
// kernel: stem_fn.1
$region0: #{stem_fn.1}
  #allocation0 [shape = 'u32[]', space=smem, size = 0x4, offset = 0x4, fixed_abs, tag = 'smem constant byte address 0x4 - core index']
  #allocation1 [shape = 'u32[144,128]{1,0:T(1,128)}', space=vmem, size = 0x12000, scoped, tag = 'internal scratch']
  #allocation2 [shape = 'f32[256,64]{1,0:T(8,128)}', space=vmem, size = 0x20000, scoped, tag = 'scratch operand']
  %s0 = inlined_call_operand.vmem [shape: bf16[8192,49], index: 0, kind: input, shape index: {}]
  %s1 = inlined_call_operand.vmem [shape: bf16[49,64], index: 1, kind: input, shape index: {}]
  %s2 = inlined_call_operand.vmem [shape: f32[1,49], index: 2, kind: input, shape index: {}]
  %s3 = inlined_call_operand.vmem [shape: f32[1,49], index: 3, kind: input, shape index: {}]
  %s4 = inlined_call_operand.vmem [shape: f32[1,64], index: 4, kind: input, shape index: {}]
  %s5 = inlined_call_operand.vmem [shape: f32[1,64], index: 5, kind: input, shape index: {}]
  %s6 = inlined_call_operand.vmem [shape: bf16[8192,64], index: 6, kind: output, shape index: {}]
  %s7 = sld [smem:[#allocation0]]
  $region65: #{stem_fn.1} parent=0
    _
  %s9 = ssub.s32 1, %s7
  %s10 = scalar_select 0, %s9, %s7
  loop: start=0, step=1, limit=34
  $region2: #{stem_fn.1} parent=0 // loop_pre_header
    _
  $region3: #{stem_fn.1} parent=0 // loop_header
    %s12 = sphi 0, %s16
    %p13 = scmp.ge.s32.totalorder %s12, 34
    %s19 = sphi 0, %s38
    %s20 = sphi 0, %s34
    %s21 = sphi 0, %s30
    %s22 = sphi 0, %s19
    %s23 = sphi 0, %s20
    %s24 = sphi 0, %s21
    %s25 = sphi 0, %s22
    %s26 = sphi 0, %s23
    %s27 = sphi 0, %s24
    %s43 = sphi 0, %s45
    %s46 = sphi 0, %s43
    %s47 = sphi 0, %s46
    %s63 = sphi 0, %s47
    %s71 = sphi 0, %s73
    %s74 = sphi 0, %s71
    %s75 = sphi 0, %s74
    %s91 = sphi 0, %s75
    %s97 = sphi 0, %s99
    %s100 = sphi 0, %s97
    %s101 = sphi 0, %s100
    %s117 = sphi 0, %s101
    %s123 = sphi 0, %s125
    %s126 = sphi 0, %s123
    %s127 = sphi 0, %s126
    %s143 = sphi 0, %s127
    %s149 = sphi 0, %s151
    %s152 = sphi 0, %s149
    %s153 = sphi 0, %s152
    %s169 = sphi 0, %s153
    %s175 = sphi 0, %s177
    %s178 = sphi 0, %s175
    %s179 = sphi 0, %s178
    %s195 = sphi 0, %s179
    %s203 = sphi 0, %s205
    %s206 = sphi 0, %s203
    %s207 = sphi 0, %s206
    %s223 = sphi 0, %s207
  $region4: #{stem_fn.1} parent=0 // loop_header_branch
    %15 = sbr.rel (%p13) target = $region8
  $region5: #{stem_fn.1} parent=0 // loop_body
    %s17 = ssub.s32 %s12, 1
    %s18 = ssub.s32 %s12, 2
    %s28 = sadd.s32 1, %s21
    %p29 = scmp.ge.s32.totalorder %s28, 1
    %s30 = scalar_select %p29, 0, %s28
    %s31 = sadd.s32 1, %s20
    %s32 = scalar_select %p29, %s31, %s20
    %p33 = scmp.ge.s32.totalorder %s32, 1
    %s34 = scalar_select %p33, 0, %s32
    %s35 = sadd.s32 1, %s19
    %s36 = scalar_select %p33, %s35, %s19
    %p37 = scmp.ge.s32.totalorder %s36, 32
    %s38 = scalar_select %p37, 0, %s36
    %s39 = ssub.s32 %s19, %s38
    %s40 = ssub.s32 %s21, %s30
    %s41 = sor.u32 %s39, %s40
    %p42 = scmp.eq.s32.totalorder %s41, 0
    %s44 = sadd.s32 %s43, 1
    %s45 = scalar_select %p42, %s43, %s44
    %p48 = pneg %p42
    %p49 = scmp.eq.s32.totalorder %s12, 31
    %p50 = por %p48, %p49
    %p51 = scmp.ne.s32.totalorder %s43, %s46
    %p52 = scmp.eq.s32.totalorder %s12, 0
    %p53 = por %p51, %p52
    %p54 = scmp.ne.s32.totalorder %s43, %s46
    %p55 = scmp.eq.s32.totalorder %s17, 31
    %p56 = por %p54, %p55
    %p57 = scmp.ne.s32.totalorder %s46, %s47
    %p58 = scmp.eq.s32.totalorder %s17, 0
    %p59 = por %p57, %p58
    %p60 = scmp.ne.s32.totalorder %s46, %s47
    %p61 = scmp.eq.s32.totalorder %s18, 31
    %p62 = por %p60, %p61
    %p64 = scmp.ne.s32.totalorder %s47, %s63
    %p65 = scmp.eq.s32.totalorder %s18, 0
    %p66 = por %p64, %p65
    %s67 = ssub.s32 %s21, %s30
    %s68 = ssub.s32 %s20, %s34
    %s69 = sor.u32 %s67, %s68
    %p70 = scmp.eq.s32.totalorder %s69, 0
    %s72 = sadd.s32 %s71, 1
    %s73 = scalar_select %p70, %s71, %s72
    %p76 = pneg %p70
    %p77 = scmp.eq.s32.totalorder %s12, 31
    %p78 = por %p76, %p77
    %p79 = scmp.ne.s32.totalorder %s71, %s74
    %p80 = scmp.eq.s32.totalorder %s12, 0
    %p81 = por %p79, %p80
    %p82 = scmp.ne.s32.totalorder %s71, %s74
    %p83 = scmp.eq.s32.totalorder %s17, 31
    %p84 = por %p82, %p83
    %p85 = scmp.ne.s32.totalorder %s74, %s75
    %p86 = scmp.eq.s32.totalorder %s17, 0
    %p87 = por %p85, %p86
    %p88 = scmp.ne.s32.totalorder %s74, %s75
    %p89 = scmp.eq.s32.totalorder %s18, 31
    %p90 = por %p88, %p89
    %p92 = scmp.ne.s32.totalorder %s75, %s91
    %p93 = scmp.eq.s32.totalorder %s18, 0
    %p94 = por %p92, %p93
    %s95 = ssub.s32 %s21, %s30
    %p96 = scmp.eq.s32.totalorder %s95, 0
    %s98 = sadd.s32 %s97, 1
    %s99 = scalar_select %p96, %s97, %s98
    %p102 = pneg %p96
    %p103 = scmp.eq.s32.totalorder %s12, 31
    %p104 = por %p102, %p103
    %p105 = scmp.ne.s32.totalorder %s97, %s100
    %p106 = scmp.eq.s32.totalorder %s12, 0
    %p107 = por %p105, %p106
    %p108 = scmp.ne.s32.totalorder %s97, %s100
    %p109 = scmp.eq.s32.totalorder %s17, 31
    %p110 = por %p108, %p109
    %p111 = scmp.ne.s32.totalorder %s100, %s101
    %p112 = scmp.eq.s32.totalorder %s17, 0
    %p113 = por %p111, %p112
    %p114 = scmp.ne.s32.totalorder %s100, %s101
    %p115 = scmp.eq.s32.totalorder %s18, 31
    %p116 = por %p114, %p115
    %p118 = scmp.ne.s32.totalorder %s101, %s117
    %p119 = scmp.eq.s32.totalorder %s18, 0
    %p120 = por %p118, %p119
    %s121 = ssub.s32 %s21, %s30
    %p122 = scmp.eq.s32.totalorder %s121, 0
    %s124 = sadd.s32 %s123, 1
    %s125 = scalar_select %p122, %s123, %s124
    %p128 = pneg %p122
    %p129 = scmp.eq.s32.totalorder %s12, 31
    %p130 = por %p128, %p129
    %p131 = scmp.ne.s32.totalorder %s123, %s126
    %p132 = scmp.eq.s32.totalorder %s12, 0
    %p133 = por %p131, %p132
    %p134 = scmp.ne.s32.totalorder %s123, %s126
    %p135 = scmp.eq.s32.totalorder %s17, 31
    %p136 = por %p134, %p135
    %p137 = scmp.ne.s32.totalorder %s126, %s127
    %p138 = scmp.eq.s32.totalorder %s17, 0
    %p139 = por %p137, %p138
    %p140 = scmp.ne.s32.totalorder %s126, %s127
    %p141 = scmp.eq.s32.totalorder %s18, 31
    %p142 = por %p140, %p141
    %p144 = scmp.ne.s32.totalorder %s127, %s143
    %p145 = scmp.eq.s32.totalorder %s18, 0
    %p146 = por %p144, %p145
    %s147 = ssub.s32 %s20, %s34
    %p148 = scmp.eq.s32.totalorder %s147, 0
    %s150 = sadd.s32 %s149, 1
    %s151 = scalar_select %p148, %s149, %s150
    %p154 = pneg %p148
    %p155 = scmp.eq.s32.totalorder %s12, 31
    %p156 = por %p154, %p155
    %p157 = scmp.ne.s32.totalorder %s149, %s152
    %p158 = scmp.eq.s32.totalorder %s12, 0
    %p159 = por %p157, %p158
    %p160 = scmp.ne.s32.totalorder %s149, %s152
    %p161 = scmp.eq.s32.totalorder %s17, 31
    %p162 = por %p160, %p161
    %p163 = scmp.ne.s32.totalorder %s152, %s153
    %p164 = scmp.eq.s32.totalorder %s17, 0
    %p165 = por %p163, %p164
    %p166 = scmp.ne.s32.totalorder %s152, %s153
    %p167 = scmp.eq.s32.totalorder %s18, 31
    %p168 = por %p166, %p167
    %p170 = scmp.ne.s32.totalorder %s153, %s169
    %p171 = scmp.eq.s32.totalorder %s18, 0
    %p172 = por %p170, %p171
    %s173 = ssub.s32 %s20, %s34
    %p174 = scmp.eq.s32.totalorder %s173, 0
    %s176 = sadd.s32 %s175, 1
    %s177 = scalar_select %p174, %s175, %s176
    %p180 = pneg %p174
    %p181 = scmp.eq.s32.totalorder %s12, 31
    %p182 = por %p180, %p181
    %p183 = scmp.ne.s32.totalorder %s175, %s178
    %p184 = scmp.eq.s32.totalorder %s12, 0
    %p185 = por %p183, %p184
    %p186 = scmp.ne.s32.totalorder %s175, %s178
    %p187 = scmp.eq.s32.totalorder %s17, 31
    %p188 = por %p186, %p187
    %p189 = scmp.ne.s32.totalorder %s178, %s179
    %p190 = scmp.eq.s32.totalorder %s17, 0
    %p191 = por %p189, %p190
    %p192 = scmp.ne.s32.totalorder %s178, %s179
    %p193 = scmp.eq.s32.totalorder %s18, 31
    %p194 = por %p192, %p193
    %p196 = scmp.ne.s32.totalorder %s179, %s195
    %p197 = scmp.eq.s32.totalorder %s18, 0
    %p198 = por %p196, %p197
    %s199 = ssub.s32 %s19, %s38
    %s200 = ssub.s32 %s20, %s34
    %s201 = sor.u32 %s199, %s200
    %p202 = scmp.eq.s32.totalorder %s201, 0
    %s204 = sadd.s32 %s203, 1
    %s205 = scalar_select %p202, %s203, %s204
    %p208 = pneg %p202
    %p209 = scmp.eq.s32.totalorder %s12, 31
    %p210 = por %p208, %p209
    %p211 = scmp.ne.s32.totalorder %s203, %s206
    %p212 = scmp.eq.s32.totalorder %s12, 0
    %p213 = por %p211, %p212
    %p214 = scmp.ne.s32.totalorder %s203, %s206
    %p215 = scmp.eq.s32.totalorder %s17, 31
    %p216 = por %p214, %p215
    %p217 = scmp.ne.s32.totalorder %s206, %s207
    %p218 = scmp.eq.s32.totalorder %s17, 0
    %p219 = por %p217, %p218
    %p220 = scmp.ne.s32.totalorder %s206, %s207
    %p221 = scmp.eq.s32.totalorder %s18, 31
    %p222 = por %p220, %p221
    %p224 = scmp.ne.s32.totalorder %s207, %s223
    %p225 = scmp.eq.s32.totalorder %s18, 0
    %p226 = por %p224, %p225
    %p227 = scmp.le.s32.totalorder 1, %s12
    %p228 = scmp.lt.s32.totalorder %s12, 33
    %p229 = pnand %p227, %p228
    %p230 = pneg %p229
    // Predicated region
    $region9: #{stem_fn.1} parent=5 // pred_check
      _
    $region10: #{stem_fn.1} parent=5 // pred_check_branch
      %232 = sbr.rel (%p229) target = $region12
    $region11: #{stem_fn.1} parent=5 // pred_region
      %s233 = ssub.s32 %s12, 1
      // Predicated region
      $region13: #{stem_fn.1} parent=11 // pred_check
        %p234 = pneg %p87
      $region14: #{stem_fn.1} parent=11 // pred_check_branch
        %236 = sbr.rel (%p234) target = $region16
      $region15: #{stem_fn.1} parent=11 // pred_region
        %s237 = smul.u32 7, %s24
        %p238 = scmp.lt.s32.totalorder %s237, 6
        %s239 = scalar_select %p238, %s237, 6
        %p240 = scmp.lt.s32.totalorder %s23, 0
        %s241 = scalar_select %p240, %s23, 0
        %s242 = sadd.s32 %s241, %s239
        %s243 = smul.addr %s242, 4
        %s244 = scalar_lea.vmem %s1, %s243
        %s245 = smul.u32 7, %s24
      $region16: #{stem_fn.1} parent=11 // pred_fallthru
        _
      // Predicated region
      $region17: #{stem_fn.1} parent=11 // pred_check
        %p246 = pneg %p113
      $region18: #{stem_fn.1} parent=11 // pred_check_branch
        %248 = sbr.rel (%p246) target = $region20
      $region19: #{stem_fn.1} parent=11 // pred_region
        %p249 = scmp.lt.s32.totalorder %s24, 0
        %s250 = scalar_select %p249, %s24, 0
        %s251 = scalar_lea.vmem %s2, %s250
      $region20: #{stem_fn.1} parent=11 // pred_fallthru
        _
      // Predicated region
      $region21: #{stem_fn.1} parent=11 // pred_check
        %p252 = pneg %p139
      $region22: #{stem_fn.1} parent=11 // pred_check_branch
        %254 = sbr.rel (%p252) target = $region24
      $region23: #{stem_fn.1} parent=11 // pred_region
        %p255 = scmp.lt.s32.totalorder %s24, 0
        %s256 = scalar_select %p255, %s24, 0
        %s257 = scalar_lea.vmem %s3, %s256
      $region24: #{stem_fn.1} parent=11 // pred_fallthru
        _
      // Predicated region
      $region25: #{stem_fn.1} parent=11 // pred_check
        %p258 = pneg %p165
      $region26: #{stem_fn.1} parent=11 // pred_check_branch
        %260 = sbr.rel (%p258) target = $region28
      $region27: #{stem_fn.1} parent=11 // pred_region
        %p261 = scmp.lt.s32.totalorder %s23, 0
        %s262 = scalar_select %p261, %s23, 0
        %s263 = scalar_lea.vmem %s4, %s262
      $region28: #{stem_fn.1} parent=11 // pred_fallthru
        _
      // Predicated region
      $region29: #{stem_fn.1} parent=11 // pred_check
        %p264 = pneg %p191
      $region30: #{stem_fn.1} parent=11 // pred_check_branch
        %266 = sbr.rel (%p264) target = $region32
      $region31: #{stem_fn.1} parent=11 // pred_region
        %p267 = scmp.lt.s32.totalorder %s23, 0
        %s268 = scalar_select %p267, %s23, 0
        %s269 = scalar_lea.vmem %s5, %s268
      $region32: #{stem_fn.1} parent=11 // pred_fallthru
        _
    $region12: #{stem_fn.1} parent=5 // pred_fallthru
      _
    %p270 = scmp.lt.s32.totalorder %s12, 32
    // Predicated region
    $region33: #{stem_fn.1} parent=5 // pred_check
      %p271 = pneg %p270
    $region34: #{stem_fn.1} parent=5 // pred_check_branch
      %273 = sbr.rel (%p271) target = $region36
    $region35: #{stem_fn.1} parent=5 // pred_region
      // Predicated region
      $region37: #{stem_fn.1} parent=35 // pred_check
        %p274 = pneg %p53
      $region38: #{stem_fn.1} parent=35 // pred_check_branch
        %276 = sbr.rel (%p274) target = $region40
      $region39: #{stem_fn.1} parent=35 // pred_region
        %s277 = smul.u32 32, %s19
        %p278 = scmp.lt.s32.totalorder %s277, 1023
        %s279 = scalar_select %p278, %s277, 1023
        %p280 = scmp.lt.s32.totalorder %s21, 0
        %s281 = scalar_select %p280, %s21, 0
        %s282 = sadd.s32 %s281, %s279
        %s283 = smul.addr %s282, 4
        %s284 = scalar_lea.vmem %s0, %s283
        %s285 = smul.u32 32, %s19
      $region40: #{stem_fn.1} parent=35 // pred_fallthru
        _
    $region36: #{stem_fn.1} parent=5 // pred_fallthru
      _
    %p286 = scmp.le.s32.totalorder 1, %s12
    %p287 = scmp.lt.s32.totalorder %s12, 33
    %p288 = pnand %p286, %p287
    %p289 = pneg %p288
    // Predicated region
    $region41: #{stem_fn.1} parent=5 // pred_check
      _
    $region42: #{stem_fn.1} parent=5 // pred_check_branch
      %291 = sbr.rel (%p288) target = $region44
    $region43: #{stem_fn.1} parent=5 // pred_region
      %s292 = ssub.s32 %s12, 1
      %s293 = smul.u32 32, %s22
      %p294 = scmp.lt.s32.totalorder %s293, 1023
      %s295 = scalar_select %p294, %s293, 1023
      %p296 = scmp.lt.s32.totalorder %s24, 0
      %s297 = scalar_select %p296, %s24, 0
      %s298 = sadd.s32 %s297, %s295
      %s299 = smul.addr %s298, 4
      %s300 = scalar_lea.vmem %s0, %s299
      %p301 = pneg %p59
      %p302 = pneg %p56
      %s303 = smul.u32 7, %s24
      %p304 = scmp.lt.s32.totalorder %s303, 6
      %s305 = scalar_select %p304, %s303, 6
      %p306 = scmp.lt.s32.totalorder %s23, 0
      %s307 = scalar_select %p306, %s23, 0
      %s308 = sadd.s32 %s307, %s305
      %s309 = smul.addr %s308, 4
      %s310 = scalar_lea.vmem %s1, %s309
      %p311 = pneg %p87
      %p312 = pneg %p84
      %p313 = scmp.lt.s32.totalorder %s24, 0
      %s314 = scalar_select %p313, %s24, 0
      %s315 = scalar_lea.vmem %s2, %s314
      %p316 = pneg %p113
      %p317 = pneg %p110
      %p318 = scmp.lt.s32.totalorder %s24, 0
      %s319 = scalar_select %p318, %s24, 0
      %s320 = scalar_lea.vmem %s3, %s319
      %p321 = pneg %p139
      %p322 = pneg %p136
      %p323 = scmp.lt.s32.totalorder %s23, 0
      %s324 = scalar_select %p323, %s23, 0
      %s325 = scalar_lea.vmem %s4, %s324
      %p326 = pneg %p165
      %p327 = pneg %p162
      %p328 = scmp.lt.s32.totalorder %s23, 0
      %s329 = scalar_select %p328, %s23, 0
      %s330 = scalar_lea.vmem %s5, %s329
      %p331 = pneg %p191
      %p332 = pneg %p188
      %p333 = pneg %p219
      %p334 = pneg %p216
      %s335 = smul.u32 32, %s22
      %p336 = scmp.lt.s32.totalorder %s335, 1023
      %s337 = scalar_select %p336, %s335, 1023
      %p338 = scmp.lt.s32.totalorder %s23, 0
      %s339 = scalar_select %p338, %s23, 0
      %s340 = sadd.s32 %s339, %s337
      %s341 = smul.addr %s340, 4
      %s342 = scalar_lea.vmem %s6, %s341
      %s343 = smul.u32 32, %s22
      %p344 = scmp.lt.s32.totalorder %s343, 1023
      %s345 = scalar_select %p344, %s343, 1023
      %p346 = scmp.lt.s32.totalorder %s24, 0
      %s347 = scalar_select %p346, %s24, 0
      %s348 = sadd.s32 %s347, %s345
      %s349 = smul.addr %s348, 4
      %s350 = scalar_lea.vmem %s0, %s349
      %s351 = smul.u32 32, %s22
      %s352 = smul.u32 7, %s24
      %p353 = scmp.lt.s32.totalorder %s352, 6
      %s354 = scalar_select %p353, %s352, 6
      %p355 = scmp.lt.s32.totalorder %s23, 0
      %s356 = scalar_select %p355, %s23, 0
      %s357 = sadd.s32 %s356, %s354
      %s358 = smul.addr %s357, 4
      %s359 = scalar_lea.vmem %s1, %s358
      %s360 = smul.u32 7, %s24
      %p361 = scmp.lt.s32.totalorder %s24, 0
      %s362 = scalar_select %p361, %s24, 0
      %s363 = scalar_lea.vmem %s2, %s362
      %p364 = scmp.lt.s32.totalorder %s24, 0
      %s365 = scalar_select %p364, %s24, 0
      %s366 = scalar_lea.vmem %s3, %s365
      %p367 = scmp.lt.s32.totalorder %s23, 0
      %s368 = scalar_select %p367, %s23, 0
      %s369 = scalar_lea.vmem %s4, %s368
      %p370 = scmp.lt.s32.totalorder %s23, 0
      %s371 = scalar_select %p370, %s23, 0
      %s372 = scalar_lea.vmem %s5, %s371
      %s373 = smul.u32 32, %s22
      %p374 = scmp.lt.s32.totalorder %s373, 1023
      %s375 = scalar_select %p374, %s373, 1023
      %p376 = scmp.lt.s32.totalorder %s23, 0
      %s377 = scalar_select %p376, %s23, 0
      %s378 = sadd.s32 %s377, %s375
      %s379 = smul.addr %s378, 4
      %s380 = scalar_lea.vmem %s6, %s379
      %s381 = smul.u32 32, %s22
      %p383 = scmp.eq.s32.totalorder %s24, 0
      // Predicated region
      $region45: #{stem_fn.1} parent=43 // pred_check
        %p384 = pneg %p383
      $region46: #{stem_fn.1} parent=43 // pred_check_branch
        %386 = sbr.rel (%p384) target = $region48
      $region47: #{stem_fn.1} parent=43 // pred_region
        %vm387 = vcmask 523264
        %388 = vst.msk [vmem:[#allocation2] sm:$0xff] %vm387, 0.0
        %389 = vst.msk [vmem:[#allocation2 + $0x8] sm:$0xff] %vm387, 0.0
        %390 = vst.msk [vmem:[#allocation2 + $0x10] sm:$0xff] %vm387, 0.0
        %391 = vst.msk [vmem:[#allocation2 + $0x18] sm:$0xff] %vm387, 0.0
        %392 = vst.msk [vmem:[#allocation2 + $0x20] sm:$0xff] %vm387, 0.0
        %393 = vst.msk [vmem:[#allocation2 + $0x28] sm:$0xff] %vm387, 0.0
        %394 = vst.msk [vmem:[#allocation2 + $0x30] sm:$0xff] %vm387, 0.0
        %395 = vst.msk [vmem:[#allocation2 + $0x38] sm:$0xff] %vm387, 0.0
        %396 = vst.msk [vmem:[#allocation2 + $0x40] sm:$0xff] %vm387, 0.0
        %397 = vst.msk [vmem:[#allocation2 + $0x48] sm:$0xff] %vm387, 0.0
        %398 = vst.msk [vmem:[#allocation2 + $0x50] sm:$0xff] %vm387, 0.0
        %399 = vst.msk [vmem:[#allocation2 + $0x58] sm:$0xff] %vm387, 0.0
        %400 = vst.msk [vmem:[#allocation2 + $0x60] sm:$0xff] %vm387, 0.0
        %401 = vst.msk [vmem:[#allocation2 + $0x68] sm:$0xff] %vm387, 0.0
        %402 = vst.msk [vmem:[#allocation2 + $0x70] sm:$0xff] %vm387, 0.0
        %403 = vst.msk [vmem:[#allocation2 + $0x78] sm:$0xff] %vm387, 0.0
        %404 = vst.msk [vmem:[#allocation2 + $0x80] sm:$0xff] %vm387, 0.0
        %405 = vst.msk [vmem:[#allocation2 + $0x88] sm:$0xff] %vm387, 0.0
        %406 = vst.msk [vmem:[#allocation2 + $0x90] sm:$0xff] %vm387, 0.0
        %407 = vst.msk [vmem:[#allocation2 + $0x98] sm:$0xff] %vm387, 0.0
        %408 = vst.msk [vmem:[#allocation2 + $0xa0] sm:$0xff] %vm387, 0.0
        %409 = vst.msk [vmem:[#allocation2 + $0xa8] sm:$0xff] %vm387, 0.0
        %410 = vst.msk [vmem:[#allocation2 + $0xb0] sm:$0xff] %vm387, 0.0
        %411 = vst.msk [vmem:[#allocation2 + $0xb8] sm:$0xff] %vm387, 0.0
        %412 = vst.msk [vmem:[#allocation2 + $0xc0] sm:$0xff] %vm387, 0.0
        %413 = vst.msk [vmem:[#allocation2 + $0xc8] sm:$0xff] %vm387, 0.0
        %414 = vst.msk [vmem:[#allocation2 + $0xd0] sm:$0xff] %vm387, 0.0
        %415 = vst.msk [vmem:[#allocation2 + $0xd8] sm:$0xff] %vm387, 0.0
        %416 = vst.msk [vmem:[#allocation2 + $0xe0] sm:$0xff] %vm387, 0.0
        %417 = vst.msk [vmem:[#allocation2 + $0xe8] sm:$0xff] %vm387, 0.0
        %418 = vst.msk [vmem:[#allocation2 + $0xf0] sm:$0xff] %vm387, 0.0
        %419 = vst.msk [vmem:[#allocation2 + $0xf8] sm:$0xff] %vm387, 0.0
      $region48: #{stem_fn.1} parent=43 // pred_fallthru
        _
      %v420 = vld [vmem:[%s350] sm:$0xf]
      %v421 = vld [vmem:[%s350 + $0x4] sm:$0xf]
      %v422 = vld [vmem:[%s350 + $0x8] sm:$0xf]
      %v423 = vld [vmem:[%s350 + $0xc] sm:$0xf]
      %v424 = vld [vmem:[%s350 + $0x10] sm:$0xf]
      %v425 = vld [vmem:[%s350 + $0x14] sm:$0xf]
      %v426 = vld [vmem:[%s350 + $0x18] sm:$0xf]
      %v427 = vld [vmem:[%s350 + $0x1c] sm:$0xf]
      %v428 = vld [vmem:[%s350 + $0x20] sm:$0xf]
      %v429 = vld [vmem:[%s350 + $0x24] sm:$0xf]
      %v430 = vld [vmem:[%s350 + $0x28] sm:$0xf]
      %v431 = vld [vmem:[%s350 + $0x2c] sm:$0xf]
      %v432 = vld [vmem:[%s350 + $0x30] sm:$0xf]
      %v433 = vld [vmem:[%s350 + $0x34] sm:$0xf]
      %v434 = vld [vmem:[%s350 + $0x38] sm:$0xf]
      %v435 = vld [vmem:[%s350 + $0x3c] sm:$0xf]
      %v436 = vld [vmem:[%s350 + $0x40] sm:$0xf]
      %v437 = vld [vmem:[%s350 + $0x44] sm:$0xf]
      %v438 = vld [vmem:[%s350 + $0x48] sm:$0xf]
      %v439 = vld [vmem:[%s350 + $0x4c] sm:$0xf]
      %v440 = vld [vmem:[%s350 + $0x50] sm:$0xf]
      %v441 = vld [vmem:[%s350 + $0x54] sm:$0xf]
      %v442 = vld [vmem:[%s350 + $0x58] sm:$0xf]
      %v443 = vld [vmem:[%s350 + $0x5c] sm:$0xf]
      %v444 = vld [vmem:[%s350 + $0x60] sm:$0xf]
      %v445 = vld [vmem:[%s350 + $0x64] sm:$0xf]
      %v446 = vld [vmem:[%s350 + $0x68] sm:$0xf]
      %v447 = vld [vmem:[%s350 + $0x6c] sm:$0xf]
      %v448 = vld [vmem:[%s350 + $0x70] sm:$0xf]
      %v449 = vld [vmem:[%s350 + $0x74] sm:$0xf]
      %v450 = vld [vmem:[%s350 + $0x78] sm:$0xf]
      %v451 = vld [vmem:[%s350 + $0x7c] sm:$0xf]
      %v452 = vld [vmem:[%s363] sm:$0x1]
      %v453 = vunpack.c.l.bf16 %v420
      %v454 = vunpack.c.l.bf16 %v421
      %v455 = vunpack.c.l.bf16 %v422
      %v456 = vunpack.c.l.bf16 %v423
      %v457 = vunpack.c.l.bf16 %v424
      %v458 = vunpack.c.l.bf16 %v425
      %v459 = vunpack.c.l.bf16 %v426
      %v460 = vunpack.c.l.bf16 %v427
      %v461 = vunpack.c.l.bf16 %v428
      %v462 = vunpack.c.l.bf16 %v429
      %v463 = vunpack.c.l.bf16 %v430
      %v464 = vunpack.c.l.bf16 %v431
      %v465 = vunpack.c.l.bf16 %v432
      %v466 = vunpack.c.l.bf16 %v433
      %v467 = vunpack.c.l.bf16 %v434
      %v468 = vunpack.c.l.bf16 %v435
      %v469 = vunpack.c.l.bf16 %v436
      %v470 = vunpack.c.l.bf16 %v437
      %v471 = vunpack.c.l.bf16 %v438
      %v472 = vunpack.c.l.bf16 %v439
      %v473 = vunpack.c.l.bf16 %v440
      %v474 = vunpack.c.l.bf16 %v441
      %v475 = vunpack.c.l.bf16 %v442
      %v476 = vunpack.c.l.bf16 %v443
      %v477 = vunpack.c.l.bf16 %v444
      %v478 = vunpack.c.l.bf16 %v445
      %v479 = vunpack.c.l.bf16 %v446
      %v480 = vunpack.c.l.bf16 %v447
      %v481 = vunpack.c.l.bf16 %v448
      %v482 = vunpack.c.l.bf16 %v449
      %v483 = vunpack.c.l.bf16 %v450
      %v484 = vunpack.c.l.bf16 %v451
      %v486 = vlaneseq
      %v487 = vshrl.u32 %v486, 7
      %v488 = vsub.s32 0, %v487
      %v489 = vrot.slane %v452, %v488
      %v491 = vmul.f32 %v453, %v489
      %v492 = vmul.f32 %v454, %v489
      %v493 = vmul.f32 %v455, %v489
      %v494 = vmul.f32 %v456, %v489
      %v495 = vmul.f32 %v457, %v489
      %v496 = vmul.f32 %v458, %v489
      %v497 = vmul.f32 %v459, %v489
      %v498 = vmul.f32 %v460, %v489
      %v499 = vmul.f32 %v461, %v489
      %v500 = vmul.f32 %v462, %v489
      %v501 = vmul.f32 %v463, %v489
      %v502 = vmul.f32 %v464, %v489
      %v503 = vmul.f32 %v465, %v489
      %v504 = vmul.f32 %v466, %v489
      %v505 = vmul.f32 %v467, %v489
      %v506 = vmul.f32 %v468, %v489
      %v507 = vmul.f32 %v469, %v489
      %v508 = vmul.f32 %v470, %v489
      %v509 = vmul.f32 %v471, %v489
      %v510 = vmul.f32 %v472, %v489
      %v511 = vmul.f32 %v473, %v489
      %v512 = vmul.f32 %v474, %v489
      %v513 = vmul.f32 %v475, %v489
      %v514 = vmul.f32 %v476, %v489
      %v515 = vmul.f32 %v477, %v489
      %v516 = vmul.f32 %v478, %v489
      %v517 = vmul.f32 %v479, %v489
      %v518 = vmul.f32 %v480, %v489
      %v519 = vmul.f32 %v481, %v489
      %v520 = vmul.f32 %v482, %v489
      %v521 = vmul.f32 %v483, %v489
      %v522 = vmul.f32 %v484, %v489
      %v523 = vld [vmem:[%s366] sm:$0x1]
      %v525 = vlaneseq
      %v526 = vshrl.u32 %v525, 7
      %v527 = vsub.s32 0, %v526
      %v528 = vrot.slane %v523, %v527
      %v530 = vadd.f32 %v491, %v528
      %v531 = vadd.f32 %v492, %v528
      %v532 = vadd.f32 %v493, %v528
      %v533 = vadd.f32 %v494, %v528
      %v534 = vadd.f32 %v495, %v528
      %v535 = vadd.f32 %v496, %v528
      %v536 = vadd.f32 %v497, %v528
      %v537 = vadd.f32 %v498, %v528
      %v538 = vadd.f32 %v499, %v528
      %v539 = vadd.f32 %v500, %v528
      %v540 = vadd.f32 %v501, %v528
      %v541 = vadd.f32 %v502, %v528
      %v542 = vadd.f32 %v503, %v528
      %v543 = vadd.f32 %v504, %v528
      %v544 = vadd.f32 %v505, %v528
      %v545 = vadd.f32 %v506, %v528
      %v546 = vadd.f32 %v507, %v528
      %v547 = vadd.f32 %v508, %v528
      %v548 = vadd.f32 %v509, %v528
      %v549 = vadd.f32 %v510, %v528
      %v550 = vadd.f32 %v511, %v528
      %v551 = vadd.f32 %v512, %v528
      %v552 = vadd.f32 %v513, %v528
      %v553 = vadd.f32 %v514, %v528
      %v554 = vadd.f32 %v515, %v528
      %v555 = vadd.f32 %v516, %v528
      %v556 = vadd.f32 %v517, %v528
      %v557 = vadd.f32 %v518, %v528
      %v558 = vadd.f32 %v519, %v528
      %v559 = vadd.f32 %v520, %v528
      %v560 = vadd.f32 %v521, %v528
      %v561 = vadd.f32 %v522, %v528
      %v562 = vld [vmem:[#allocation2] sm:$0xff]
      %v563 = vld [vmem:[#allocation2 + $0x8] sm:$0xff]
      %v564 = vld [vmem:[#allocation2 + $0x10] sm:$0xff]
      %v565 = vld [vmem:[#allocation2 + $0x18] sm:$0xff]
      %v566 = vld [vmem:[#allocation2 + $0x20] sm:$0xff]
      %v567 = vld [vmem:[#allocation2 + $0x28] sm:$0xff]
      %v568 = vld [vmem:[#allocation2 + $0x30] sm:$0xff]
      %v569 = vld [vmem:[#allocation2 + $0x38] sm:$0xff]
      %v570 = vld [vmem:[#allocation2 + $0x40] sm:$0xff]
      %v571 = vld [vmem:[#allocation2 + $0x48] sm:$0xff]
      %v572 = vld [vmem:[#allocation2 + $0x50] sm:$0xff]
      %v573 = vld [vmem:[#allocation2 + $0x58] sm:$0xff]
      %v574 = vld [vmem:[#allocation2 + $0x60] sm:$0xff]
      %v575 = vld [vmem:[#allocation2 + $0x68] sm:$0xff]
      %v576 = vld [vmem:[#allocation2 + $0x70] sm:$0xff]
      %v577 = vld [vmem:[#allocation2 + $0x78] sm:$0xff]
      %v578 = vld [vmem:[#allocation2 + $0x80] sm:$0xff]
      %v579 = vld [vmem:[#allocation2 + $0x88] sm:$0xff]
      %v580 = vld [vmem:[#allocation2 + $0x90] sm:$0xff]
      %v581 = vld [vmem:[#allocation2 + $0x98] sm:$0xff]
      %v582 = vld [vmem:[#allocation2 + $0xa0] sm:$0xff]
      %v583 = vld [vmem:[#allocation2 + $0xa8] sm:$0xff]
      %v584 = vld [vmem:[#allocation2 + $0xb0] sm:$0xff]
      %v585 = vld [vmem:[#allocation2 + $0xb8] sm:$0xff]
      %v586 = vld [vmem:[#allocation2 + $0xc0] sm:$0xff]
      %v587 = vld [vmem:[#allocation2 + $0xc8] sm:$0xff]
      %v588 = vld [vmem:[#allocation2 + $0xd0] sm:$0xff]
      %v589 = vld [vmem:[#allocation2 + $0xd8] sm:$0xff]
      %v590 = vld [vmem:[#allocation2 + $0xe0] sm:$0xff]
      %v591 = vld [vmem:[#allocation2 + $0xe8] sm:$0xff]
      %v592 = vld [vmem:[#allocation2 + $0xf0] sm:$0xff]
      %v593 = vld [vmem:[#allocation2 + $0xf8] sm:$0xff]
      %v594 = vpack.c.bf16 %v531, %v530
      %v595 = vpack.c.bf16 %v533, %v532
      %v596 = vpack.c.bf16 %v535, %v534
      %v597 = vpack.c.bf16 %v537, %v536
      %v598 = vpack.c.bf16 %v539, %v538
      %v599 = vpack.c.bf16 %v541, %v540
      %v600 = vpack.c.bf16 %v543, %v542
      %v601 = vpack.c.bf16 %v545, %v544
      %v602 = vpack.c.bf16 %v547, %v546
      %v603 = vpack.c.bf16 %v549, %v548
      %v604 = vpack.c.bf16 %v551, %v550
      %v605 = vpack.c.bf16 %v553, %v552
      %v606 = vpack.c.bf16 %v555, %v554
      %v607 = vpack.c.bf16 %v557, %v556
      %v608 = vpack.c.bf16 %v559, %v558
      %v609 = vpack.c.bf16 %v561, %v560
      %v610 = vld [vmem:[%s359] sm:$0xf]
      %v611 = vld [vmem:[%s359 + $0x4] sm:$0xf]
      %v612 = vld [vmem:[%s359 + $0x8] sm:$0xf]
      %v613 = vld [vmem:[%s359 + $0xc] sm:$0xf]
      %v614 = vld [vmem:[%s359 + $0x10] sm:$0xf]
      %v615 = vld [vmem:[%s359 + $0x14] sm:$0xf]
      %v616 = vld [vmem:[%s359 + $0x18] sm:$0x1]
      %v624 = vunpack.c.l.b16 %v610
      %v625 = vunpack.c.l.b16 %v611
      %v626 = vunpack.c.l.b16 %v612
      %v627 = vunpack.c.l.b16 %v613
      %v628 = vunpack.c.l.b16 %v614
      %v629 = vunpack.c.l.b16 %v615
      %v630 = vunpack.c.l.b16 %v616
      %v631 = vpack.c.b16 %v625, %v624
      %v632 = vpack.c.b16 %v627, %v626
      %v633 = vpack.c.b16 %v629, %v628
      %v634 = vpack.c.b16 %v630, %v630
      %vm638 = vcmask 400384
      %v640 = vsel %vm638, %v594, 0
      %v643 = vsel %vm638, %v595, 0
      %v646 = vsel %vm638, %v596, 0
      %v649 = vsel %vm638, %v597, 0
      %v652 = vsel %vm638, %v598, 0
      %v655 = vsel %vm638, %v599, 0
      %v658 = vsel %vm638, %v600, 0
      %v661 = vsel %vm638, %v601, 0
      %v664 = vsel %vm638, %v602, 0
      %v667 = vsel %vm638, %v603, 0
      %v670 = vsel %vm638, %v604, 0
      %v673 = vsel %vm638, %v605, 0
      %v676 = vsel %vm638, %v606, 0
      %v679 = vsel %vm638, %v607, 0
      %v682 = vsel %vm638, %v608, 0
      %v685 = vsel %vm638, %v609, 0
      %vm687 = vcmask 1040384
      %v688 = vsel 0, 4294967295, 65535
      %v689 = vsel %vm687, %v688, 0
      %v691 = vand.u32 %v634, %v689
      %693 = vmatprep.subr.bf16.mxu0 0
      %694 = vmatpush1.bf16.msra.mxu0 0
      %695 = vmatprep.subr.bf16.mxu0 0
      %696 = vmatpush1.bf16.msra.mxu0 0
      %697 = vmatprep.subr.bf16.mxu0 0
      %698 = vmatpush1.bf16.msra.mxu0 0
      %699 = vmatprep.subr.bf16.mxu0 0
      %700 = vmatpush1.bf16.msra.mxu0 0
      %701 = vmatprep.subr.bf16.mxu0 0
      %702 = vmatpush1.bf16.msra.mxu0 %v691
      %703 = vmatprep.subr.bf16.mxu0 0
      %704 = vmatpush1.bf16.msra.mxu0 %v633
      %705 = vmatprep.subr.bf16.mxu0 0
      %706 = vmatpush1.bf16.msra.mxu0 %v632
      %707 = vmatprep.subr.bf16.mxu0 0
      %708 = vmatpush1.bf16.msra.mxu0 %v631
      %709 = vmatprep.subr.bf16.mxu0 0
      %710 = vmatpush2.bf16.msra.mxu0 0
      %711 = vmatprep.subr.bf16.mxu0 0
      %712 = vmatpush2.bf16.msra.mxu0 0
      %713 = vmatprep.subr.bf16.mxu0 0
      %714 = vmatpush2.bf16.msra.mxu0 0
      %715 = vmatprep.subr.bf16.mxu0 0
      %716 = vmatpush2.bf16.msra.mxu0 0
      %717 = vmatprep.subr.bf16.mxu0 0
      %718 = vmatpush2.bf16.msra.mxu0 0
      %719 = vmatprep.subr.bf16.mxu0 0
      %720 = vmatpush2.bf16.msra.mxu0 0
      %721 = vmatprep.subr.bf16.mxu0 0
      %722 = vmatpush2.bf16.msra.mxu0 0
      %723 = vmatprep.subr.bf16.mxu0 0
      %724 = vmatpush2.bf16.msra.mxu0 0
      %725 = vmatprep.mubr.bf16.mxu0 0
      %726 = vmatmul.mubr.bf16.gmra.mxu0 %v640
      %v727 = vpop.f32.mrf.mxu0
      %v728 = vadd.f32 0.0, %v727
      %v729 = vpop.f32.mrf.mxu0
      %v730 = vpop.f32.mrf.mxu0
      %v731 = vadd.f32 0.0, %v730
      %v732 = vpop.f32.mrf.mxu0
      %733 = vmatprep.mubr.bf16.mxu0 0
      %734 = vmatmul.mubr.bf16.gmra.mxu0 %v643
      %v735 = vpop.f32.mrf.mxu0
      %v736 = vadd.f32 0.0, %v735
      %v737 = vpop.f32.mrf.mxu0
      %v738 = vpop.f32.mrf.mxu0
      %v739 = vadd.f32 0.0, %v738
      %v740 = vpop.f32.mrf.mxu0
      %741 = vmatprep.mubr.bf16.mxu0 0
      %742 = vmatmul.mubr.bf16.gmra.mxu0 %v646
      %v743 = vpop.f32.mrf.mxu0
      %v744 = vadd.f32 0.0, %v743
      %v745 = vpop.f32.mrf.mxu0
      %v746 = vpop.f32.mrf.mxu0
      %v747 = vadd.f32 0.0, %v746
      %v748 = vpop.f32.mrf.mxu0
      %749 = vmatprep.mubr.bf16.mxu0 0
      %750 = vmatmul.mubr.bf16.gmra.mxu0 %v649
      %v751 = vpop.f32.mrf.mxu0
      %v752 = vadd.f32 0.0, %v751
      %v753 = vpop.f32.mrf.mxu0
      %v754 = vpop.f32.mrf.mxu0
      %v755 = vadd.f32 0.0, %v754
      %v756 = vpop.f32.mrf.mxu0
      %757 = vmatprep.mubr.bf16.mxu0 0
      %758 = vmatmul.mubr.bf16.gmra.mxu0 %v652
      %v759 = vpop.f32.mrf.mxu0
      %v760 = vadd.f32 0.0, %v759
      %v761 = vpop.f32.mrf.mxu0
      %v762 = vpop.f32.mrf.mxu0
      %v763 = vadd.f32 0.0, %v762
      %v764 = vpop.f32.mrf.mxu0
      %765 = vmatprep.mubr.bf16.mxu0 0
      %766 = vmatmul.mubr.bf16.gmra.mxu0 %v655
      %v767 = vpop.f32.mrf.mxu0
      %v768 = vadd.f32 0.0, %v767
      %v769 = vpop.f32.mrf.mxu0
      %v770 = vpop.f32.mrf.mxu0
      %v771 = vadd.f32 0.0, %v770
      %v772 = vpop.f32.mrf.mxu0
      %773 = vmatprep.mubr.bf16.mxu0 0
      %774 = vmatmul.mubr.bf16.gmra.mxu0 %v658
      %v775 = vpop.f32.mrf.mxu0
      %v776 = vadd.f32 0.0, %v775
      %v777 = vpop.f32.mrf.mxu0
      %v778 = vpop.f32.mrf.mxu0
      %v779 = vadd.f32 0.0, %v778
      %v780 = vpop.f32.mrf.mxu0
      %781 = vmatprep.mubr.bf16.mxu0 0
      %782 = vmatmul.mubr.bf16.gmra.mxu0 %v661
      %v783 = vpop.f32.mrf.mxu0
      %v784 = vadd.f32 0.0, %v783
      %v785 = vpop.f32.mrf.mxu0
      %v786 = vpop.f32.mrf.mxu0
      %v787 = vadd.f32 0.0, %v786
      %v788 = vpop.f32.mrf.mxu0
      %789 = vmatprep.mubr.bf16.mxu0 0
      %790 = vmatmul.mubr.bf16.gmra.mxu0 %v664
      %v791 = vpop.f32.mrf.mxu0
      %v792 = vadd.f32 0.0, %v791
      %v793 = vpop.f32.mrf.mxu0
      %v794 = vpop.f32.mrf.mxu0
      %v795 = vadd.f32 0.0, %v794
      %v796 = vpop.f32.mrf.mxu0
      %797 = vmatprep.mubr.bf16.mxu0 0
      %798 = vmatmul.mubr.bf16.gmra.mxu0 %v667
      %v799 = vpop.f32.mrf.mxu0
      %v800 = vadd.f32 0.0, %v799
      %v801 = vpop.f32.mrf.mxu0
      %v802 = vpop.f32.mrf.mxu0
      %v803 = vadd.f32 0.0, %v802
      %v804 = vpop.f32.mrf.mxu0
      %805 = vmatprep.mubr.bf16.mxu0 0
      %806 = vmatmul.mubr.bf16.gmra.mxu0 %v670
      %v807 = vpop.f32.mrf.mxu0
      %v808 = vadd.f32 0.0, %v807
      %v809 = vpop.f32.mrf.mxu0
      %v810 = vpop.f32.mrf.mxu0
      %v811 = vadd.f32 0.0, %v810
      %v812 = vpop.f32.mrf.mxu0
      %813 = vmatprep.mubr.bf16.mxu0 0
      %814 = vmatmul.mubr.bf16.gmra.mxu0 %v673
      %v815 = vpop.f32.mrf.mxu0
      %v816 = vadd.f32 0.0, %v815
      %v817 = vpop.f32.mrf.mxu0
      %v818 = vpop.f32.mrf.mxu0
      %v819 = vadd.f32 0.0, %v818
      %v820 = vpop.f32.mrf.mxu0
      %821 = vmatprep.mubr.bf16.mxu0 0
      %822 = vmatmul.mubr.bf16.gmra.mxu0 %v676
      %v823 = vpop.f32.mrf.mxu0
      %v824 = vadd.f32 0.0, %v823
      %v825 = vpop.f32.mrf.mxu0
      %v826 = vpop.f32.mrf.mxu0
      %v827 = vadd.f32 0.0, %v826
      %v828 = vpop.f32.mrf.mxu0
      %829 = vmatprep.mubr.bf16.mxu0 0
      %830 = vmatmul.mubr.bf16.gmra.mxu0 %v679
      %v831 = vpop.f32.mrf.mxu0
      %v832 = vadd.f32 0.0, %v831
      %v833 = vpop.f32.mrf.mxu0
      %v834 = vpop.f32.mrf.mxu0
      %v835 = vadd.f32 0.0, %v834
      %v836 = vpop.f32.mrf.mxu0
      %837 = vmatprep.mubr.bf16.mxu0 0
      %838 = vmatmul.mubr.bf16.gmra.mxu0 %v682
      %v839 = vpop.f32.mrf.mxu0
      %v840 = vadd.f32 0.0, %v839
      %v841 = vpop.f32.mrf.mxu0
      %v842 = vpop.f32.mrf.mxu0
      %v843 = vadd.f32 0.0, %v842
      %v844 = vpop.f32.mrf.mxu0
      %845 = vmatprep.mubr.bf16.mxu0 0
      %846 = vmatmul.mubr.bf16.gmra.mxu0 %v685
      %v847 = vpop.f32.mrf.mxu0
      %v848 = vadd.f32 0.0, %v847
      %v849 = vpop.f32.mrf.mxu0
      %v850 = vpop.f32.mrf.mxu0
      %v851 = vadd.f32 0.0, %v850
      %v852 = vpop.f32.mrf.mxu0
      %853 = vdwg.mxu0
      %v854 = vadd.f32 %v562, %v728
      %v855 = vadd.f32 %v563, %v731
      %v856 = vadd.f32 %v564, %v736
      %v857 = vadd.f32 %v565, %v739
      %v858 = vadd.f32 %v566, %v744
      %v859 = vadd.f32 %v567, %v747
      %v860 = vadd.f32 %v568, %v752
      %v861 = vadd.f32 %v569, %v755
      %v862 = vadd.f32 %v570, %v760
      %v863 = vadd.f32 %v571, %v763
      %v864 = vadd.f32 %v572, %v768
      %v865 = vadd.f32 %v573, %v771
      %v866 = vadd.f32 %v574, %v776
      %v867 = vadd.f32 %v575, %v779
      %v868 = vadd.f32 %v576, %v784
      %v869 = vadd.f32 %v577, %v787
      %v870 = vadd.f32 %v578, %v792
      %v871 = vadd.f32 %v579, %v795
      %v872 = vadd.f32 %v580, %v800
      %v873 = vadd.f32 %v581, %v803
      %v874 = vadd.f32 %v582, %v808
      %v875 = vadd.f32 %v583, %v811
      %v876 = vadd.f32 %v584, %v816
      %v877 = vadd.f32 %v585, %v819
      %v878 = vadd.f32 %v586, %v824
      %v879 = vadd.f32 %v587, %v827
      %v880 = vadd.f32 %v588, %v832
      %v881 = vadd.f32 %v589, %v835
      %v882 = vadd.f32 %v590, %v840
      %v883 = vadd.f32 %v591, %v843
      %v884 = vadd.f32 %v592, %v848
      %v885 = vadd.f32 %v593, %v851
      %vm886 = vcmask 523264
      %887 = vst.msk [vmem:[#allocation2] sm:$0xff] %vm886, %v854
      %888 = vst.msk [vmem:[#allocation2 + $0x8] sm:$0xff] %vm886, %v855
      %889 = vst.msk [vmem:[#allocation2 + $0x10] sm:$0xff] %vm886, %v856
      %890 = vst.msk [vmem:[#allocation2 + $0x18] sm:$0xff] %vm886, %v857
      %891 = vst.msk [vmem:[#allocation2 + $0x20] sm:$0xff] %vm886, %v858
      %892 = vst.msk [vmem:[#allocation2 + $0x28] sm:$0xff] %vm886, %v859
      %893 = vst.msk [vmem:[#allocation2 + $0x30] sm:$0xff] %vm886, %v860
      %894 = vst.msk [vmem:[#allocation2 + $0x38] sm:$0xff] %vm886, %v861
      %895 = vst.msk [vmem:[#allocation2 + $0x40] sm:$0xff] %vm886, %v862
      %896 = vst.msk [vmem:[#allocation2 + $0x48] sm:$0xff] %vm886, %v863
      %897 = vst.msk [vmem:[#allocation2 + $0x50] sm:$0xff] %vm886, %v864
      %898 = vst.msk [vmem:[#allocation2 + $0x58] sm:$0xff] %vm886, %v865
      %899 = vst.msk [vmem:[#allocation2 + $0x60] sm:$0xff] %vm886, %v866
      %900 = vst.msk [vmem:[#allocation2 + $0x68] sm:$0xff] %vm886, %v867
      %901 = vst.msk [vmem:[#allocation2 + $0x70] sm:$0xff] %vm886, %v868
      %902 = vst.msk [vmem:[#allocation2 + $0x78] sm:$0xff] %vm886, %v869
      %903 = vst.msk [vmem:[#allocation2 + $0x80] sm:$0xff] %vm886, %v870
      %904 = vst.msk [vmem:[#allocation2 + $0x88] sm:$0xff] %vm886, %v871
      %905 = vst.msk [vmem:[#allocation2 + $0x90] sm:$0xff] %vm886, %v872
      %906 = vst.msk [vmem:[#allocation2 + $0x98] sm:$0xff] %vm886, %v873
      %907 = vst.msk [vmem:[#allocation2 + $0xa0] sm:$0xff] %vm886, %v874
      %908 = vst.msk [vmem:[#allocation2 + $0xa8] sm:$0xff] %vm886, %v875
      %909 = vst.msk [vmem:[#allocation2 + $0xb0] sm:$0xff] %vm886, %v876
      %910 = vst.msk [vmem:[#allocation2 + $0xb8] sm:$0xff] %vm886, %v877
      %911 = vst.msk [vmem:[#allocation2 + $0xc0] sm:$0xff] %vm886, %v878
      %912 = vst.msk [vmem:[#allocation2 + $0xc8] sm:$0xff] %vm886, %v879
      %913 = vst.msk [vmem:[#allocation2 + $0xd0] sm:$0xff] %vm886, %v880
      %914 = vst.msk [vmem:[#allocation2 + $0xd8] sm:$0xff] %vm886, %v881
      %915 = vst.msk [vmem:[#allocation2 + $0xe0] sm:$0xff] %vm886, %v882
      %916 = vst.msk [vmem:[#allocation2 + $0xe8] sm:$0xff] %vm886, %v883
      %917 = vst.msk [vmem:[#allocation2 + $0xf0] sm:$0xff] %vm886, %v884
      %918 = vst.msk [vmem:[#allocation2 + $0xf8] sm:$0xff] %vm886, %v885
      // Predicated region
      $region49: #{stem_fn.1} parent=43 // pred_check
        %p919 = pneg %p383
      $region50: #{stem_fn.1} parent=43 // pred_check_branch
        %921 = sbr.rel (%p919) target = $region52
      $region51: #{stem_fn.1} parent=43 // pred_region
        %v922 = vld [vmem:[#allocation2] sm:$0xff]
        %v923 = vld [vmem:[#allocation2 + $0x8] sm:$0xff]
        %v924 = vld [vmem:[#allocation2 + $0x10] sm:$0xff]
        %v925 = vld [vmem:[#allocation2 + $0x18] sm:$0xff]
        %v926 = vld [vmem:[#allocation2 + $0x20] sm:$0xff]
        %v927 = vld [vmem:[#allocation2 + $0x28] sm:$0xff]
        %v928 = vld [vmem:[#allocation2 + $0x30] sm:$0xff]
        %v929 = vld [vmem:[#allocation2 + $0x38] sm:$0xff]
        %v930 = vld [vmem:[#allocation2 + $0x40] sm:$0xff]
        %v931 = vld [vmem:[#allocation2 + $0x48] sm:$0xff]
        %v932 = vld [vmem:[#allocation2 + $0x50] sm:$0xff]
        %v933 = vld [vmem:[#allocation2 + $0x58] sm:$0xff]
        %v934 = vld [vmem:[#allocation2 + $0x60] sm:$0xff]
        %v935 = vld [vmem:[#allocation2 + $0x68] sm:$0xff]
        %v936 = vld [vmem:[#allocation2 + $0x70] sm:$0xff]
        %v937 = vld [vmem:[#allocation2 + $0x78] sm:$0xff]
        %v938 = vld [vmem:[#allocation2 + $0x80] sm:$0xff]
        %v939 = vld [vmem:[#allocation2 + $0x88] sm:$0xff]
        %v940 = vld [vmem:[#allocation2 + $0x90] sm:$0xff]
        %v941 = vld [vmem:[#allocation2 + $0x98] sm:$0xff]
        %v942 = vld [vmem:[#allocation2 + $0xa0] sm:$0xff]
        %v943 = vld [vmem:[#allocation2 + $0xa8] sm:$0xff]
        %v944 = vld [vmem:[#allocation2 + $0xb0] sm:$0xff]
        %v945 = vld [vmem:[#allocation2 + $0xb8] sm:$0xff]
        %v946 = vld [vmem:[#allocation2 + $0xc0] sm:$0xff]
        %v947 = vld [vmem:[#allocation2 + $0xc8] sm:$0xff]
        %v948 = vld [vmem:[#allocation2 + $0xd0] sm:$0xff]
        %v949 = vld [vmem:[#allocation2 + $0xd8] sm:$0xff]
        %v950 = vld [vmem:[#allocation2 + $0xe0] sm:$0xff]
        %v951 = vld [vmem:[#allocation2 + $0xe8] sm:$0xff]
        %v952 = vld [vmem:[#allocation2 + $0xf0] sm:$0xff]
        %v953 = vld [vmem:[#allocation2 + $0xf8] sm:$0xff]
        %v954 = vld [vmem:[%s369] sm:$0x1]
        %v956 = vlaneseq
        %v957 = vshrl.u32 %v956, 7
        %v958 = vsub.s32 0, %v957
        %v959 = vrot.slane %v954, %v958
        %v961 = vmul.f32 %v922, %v959
        %v962 = vmul.f32 %v923, %v959
        %v963 = vmul.f32 %v924, %v959
        %v964 = vmul.f32 %v925, %v959
        %v965 = vmul.f32 %v926, %v959
        %v966 = vmul.f32 %v927, %v959
        %v967 = vmul.f32 %v928, %v959
        %v968 = vmul.f32 %v929, %v959
        %v969 = vmul.f32 %v930, %v959
        %v970 = vmul.f32 %v931, %v959
        %v971 = vmul.f32 %v932, %v959
        %v972 = vmul.f32 %v933, %v959
        %v973 = vmul.f32 %v934, %v959
        %v974 = vmul.f32 %v935, %v959
        %v975 = vmul.f32 %v936, %v959
        %v976 = vmul.f32 %v937, %v959
        %v977 = vmul.f32 %v938, %v959
        %v978 = vmul.f32 %v939, %v959
        %v979 = vmul.f32 %v940, %v959
        %v980 = vmul.f32 %v941, %v959
        %v981 = vmul.f32 %v942, %v959
        %v982 = vmul.f32 %v943, %v959
        %v983 = vmul.f32 %v944, %v959
        %v984 = vmul.f32 %v945, %v959
        %v985 = vmul.f32 %v946, %v959
        %v986 = vmul.f32 %v947, %v959
        %v987 = vmul.f32 %v948, %v959
        %v988 = vmul.f32 %v949, %v959
        %v989 = vmul.f32 %v950, %v959
        %v990 = vmul.f32 %v951, %v959
        %v991 = vmul.f32 %v952, %v959
        %v992 = vmul.f32 %v953, %v959
        %v993 = vld [vmem:[%s372] sm:$0x1]
        %v995 = vlaneseq
        %v996 = vshrl.u32 %v995, 7
        %v997 = vsub.s32 0, %v996
        %v998 = vrot.slane %v993, %v997
        %v1000 = vadd.f32 %v961, %v998
        %v1001 = vadd.f32 %v962, %v998
        %v1002 = vadd.f32 %v963, %v998
        %v1003 = vadd.f32 %v964, %v998
        %v1004 = vadd.f32 %v965, %v998
        %v1005 = vadd.f32 %v966, %v998
        %v1006 = vadd.f32 %v967, %v998
        %v1007 = vadd.f32 %v968, %v998
        %v1008 = vadd.f32 %v969, %v998
        %v1009 = vadd.f32 %v970, %v998
        %v1010 = vadd.f32 %v971, %v998
        %v1011 = vadd.f32 %v972, %v998
        %v1012 = vadd.f32 %v973, %v998
        %v1013 = vadd.f32 %v974, %v998
        %v1014 = vadd.f32 %v975, %v998
        %v1015 = vadd.f32 %v976, %v998
        %v1016 = vadd.f32 %v977, %v998
        %v1017 = vadd.f32 %v978, %v998
        %v1018 = vadd.f32 %v979, %v998
        %v1019 = vadd.f32 %v980, %v998
        %v1020 = vadd.f32 %v981, %v998
        %v1021 = vadd.f32 %v982, %v998
        %v1022 = vadd.f32 %v983, %v998
        %v1023 = vadd.f32 %v984, %v998
        %v1024 = vadd.f32 %v985, %v998
        %v1025 = vadd.f32 %v986, %v998
        %v1026 = vadd.f32 %v987, %v998
        %v1027 = vadd.f32 %v988, %v998
        %v1028 = vadd.f32 %v989, %v998
        %v1029 = vadd.f32 %v990, %v998
        %v1030 = vadd.f32 %v991, %v998
        %v1031 = vadd.f32 %v992, %v998
        %v1032 = vmax.f32 %v1000, 0.0
        %v1033 = vmax.f32 %v1001, 0.0
        %v1034 = vmax.f32 %v1002, 0.0
        %v1035 = vmax.f32 %v1003, 0.0
        %v1036 = vmax.f32 %v1004, 0.0
        %v1037 = vmax.f32 %v1005, 0.0
        %v1038 = vmax.f32 %v1006, 0.0
        %v1039 = vmax.f32 %v1007, 0.0
        %v1040 = vmax.f32 %v1008, 0.0
        %v1041 = vmax.f32 %v1009, 0.0
        %v1042 = vmax.f32 %v1010, 0.0
        %v1043 = vmax.f32 %v1011, 0.0
        %v1044 = vmax.f32 %v1012, 0.0
        %v1045 = vmax.f32 %v1013, 0.0
        %v1046 = vmax.f32 %v1014, 0.0
        %v1047 = vmax.f32 %v1015, 0.0
        %v1048 = vmax.f32 %v1016, 0.0
        %v1049 = vmax.f32 %v1017, 0.0
        %v1050 = vmax.f32 %v1018, 0.0
        %v1051 = vmax.f32 %v1019, 0.0
        %v1052 = vmax.f32 %v1020, 0.0
        %v1053 = vmax.f32 %v1021, 0.0
        %v1054 = vmax.f32 %v1022, 0.0
        %v1055 = vmax.f32 %v1023, 0.0
        %v1056 = vmax.f32 %v1024, 0.0
        %v1057 = vmax.f32 %v1025, 0.0
        %v1058 = vmax.f32 %v1026, 0.0
        %v1059 = vmax.f32 %v1027, 0.0
        %v1060 = vmax.f32 %v1028, 0.0
        %v1061 = vmax.f32 %v1029, 0.0
        %v1062 = vmax.f32 %v1030, 0.0
        %v1063 = vmax.f32 %v1031, 0.0
        %v1064 = vpack.c.bf16 %v1033, %v1032
        %v1065 = vpack.c.bf16 %v1035, %v1034
        %v1066 = vpack.c.bf16 %v1037, %v1036
        %v1067 = vpack.c.bf16 %v1039, %v1038
        %v1068 = vpack.c.bf16 %v1041, %v1040
        %v1069 = vpack.c.bf16 %v1043, %v1042
        %v1070 = vpack.c.bf16 %v1045, %v1044
        %v1071 = vpack.c.bf16 %v1047, %v1046
        %v1072 = vpack.c.bf16 %v1049, %v1048
        %v1073 = vpack.c.bf16 %v1051, %v1050
        %v1074 = vpack.c.bf16 %v1053, %v1052
        %v1075 = vpack.c.bf16 %v1055, %v1054
        %v1076 = vpack.c.bf16 %v1057, %v1056
        %v1077 = vpack.c.bf16 %v1059, %v1058
        %v1078 = vpack.c.bf16 %v1061, %v1060
        %v1079 = vpack.c.bf16 %v1063, %v1062
        %v1096 = vunpack.c.l.b16 %v1064
        %v1097 = vunpack.c.h.b16 %v1064
        %v1098 = vunpack.c.l.b16 %v1065
        %v1099 = vunpack.c.h.b16 %v1065
        %v1100 = vunpack.c.l.b16 %v1066
        %v1101 = vunpack.c.h.b16 %v1066
        %v1102 = vunpack.c.l.b16 %v1067
        %v1103 = vunpack.c.h.b16 %v1067
        %v1104 = vunpack.c.l.b16 %v1068
        %v1105 = vunpack.c.h.b16 %v1068
        %v1106 = vunpack.c.l.b16 %v1069
        %v1107 = vunpack.c.h.b16 %v1069
        %v1108 = vunpack.c.l.b16 %v1070
        %v1109 = vunpack.c.h.b16 %v1070
        %v1110 = vunpack.c.l.b16 %v1071
        %v1111 = vunpack.c.h.b16 %v1071
        %v1112 = vunpack.c.l.b16 %v1072
        %v1113 = vunpack.c.h.b16 %v1072
        %v1114 = vunpack.c.l.b16 %v1073
        %v1115 = vunpack.c.h.b16 %v1073
        %v1116 = vunpack.c.l.b16 %v1074
        %v1117 = vunpack.c.h.b16 %v1074
        %v1118 = vunpack.c.l.b16 %v1075
        %v1119 = vunpack.c.h.b16 %v1075
        %v1120 = vunpack.c.l.b16 %v1076
        %v1121 = vunpack.c.h.b16 %v1076
        %v1122 = vunpack.c.l.b16 %v1077
        %v1123 = vunpack.c.h.b16 %v1077
        %v1124 = vunpack.c.l.b16 %v1078
        %v1125 = vunpack.c.h.b16 %v1078
        %v1126 = vunpack.c.l.b16 %v1079
        %v1127 = vunpack.c.h.b16 %v1079
        %v1128 = vpack.c.b16 %v1096, %v1096
        %v1129 = vpack.c.b16 %v1097, %v1097
        %v1130 = vpack.c.b16 %v1098, %v1098
        %v1131 = vpack.c.b16 %v1099, %v1099
        %v1132 = vpack.c.b16 %v1100, %v1100
        %v1133 = vpack.c.b16 %v1101, %v1101
        %v1134 = vpack.c.b16 %v1102, %v1102
        %v1135 = vpack.c.b16 %v1103, %v1103
        %v1136 = vpack.c.b16 %v1104, %v1104
        %v1137 = vpack.c.b16 %v1105, %v1105
        %v1138 = vpack.c.b16 %v1106, %v1106
        %v1139 = vpack.c.b16 %v1107, %v1107
        %v1140 = vpack.c.b16 %v1108, %v1108
        %v1141 = vpack.c.b16 %v1109, %v1109
        %v1142 = vpack.c.b16 %v1110, %v1110
        %v1143 = vpack.c.b16 %v1111, %v1111
        %v1144 = vpack.c.b16 %v1112, %v1112
        %v1145 = vpack.c.b16 %v1113, %v1113
        %v1146 = vpack.c.b16 %v1114, %v1114
        %v1147 = vpack.c.b16 %v1115, %v1115
        %v1148 = vpack.c.b16 %v1116, %v1116
        %v1149 = vpack.c.b16 %v1117, %v1117
        %v1150 = vpack.c.b16 %v1118, %v1118
        %v1151 = vpack.c.b16 %v1119, %v1119
        %v1152 = vpack.c.b16 %v1120, %v1120
        %v1153 = vpack.c.b16 %v1121, %v1121
        %v1154 = vpack.c.b16 %v1122, %v1122
        %v1155 = vpack.c.b16 %v1123, %v1123
        %v1156 = vpack.c.b16 %v1124, %v1124
        %v1157 = vpack.c.b16 %v1125, %v1125
        %v1158 = vpack.c.b16 %v1126, %v1126
        %v1159 = vpack.c.b16 %v1127, %v1127
        %vm1192 = vcmask 519168
        %1193 = vst.msk [vmem:[%s380] sm:$0xf] %vm1192, %v1128
        %1194 = vst.msk [vmem:[%s380 + $0x4] sm:$0xf] %vm1192, %v1129
        %1195 = vst.msk [vmem:[%s380 + $0x8] sm:$0xf] %vm1192, %v1130
        %1196 = vst.msk [vmem:[%s380 + $0xc] sm:$0xf] %vm1192, %v1131
        %1197 = vst.msk [vmem:[%s380 + $0x10] sm:$0xf] %vm1192, %v1132
        %1198 = vst.msk [vmem:[%s380 + $0x14] sm:$0xf] %vm1192, %v1133
        %1199 = vst.msk [vmem:[%s380 + $0x18] sm:$0xf] %vm1192, %v1134
        %1200 = vst.msk [vmem:[%s380 + $0x1c] sm:$0xf] %vm1192, %v1135
        %1201 = vst.msk [vmem:[%s380 + $0x20] sm:$0xf] %vm1192, %v1136
        %1202 = vst.msk [vmem:[%s380 + $0x24] sm:$0xf] %vm1192, %v1137
        %1203 = vst.msk [vmem:[%s380 + $0x28] sm:$0xf] %vm1192, %v1138
        %1204 = vst.msk [vmem:[%s380 + $0x2c] sm:$0xf] %vm1192, %v1139
        %1205 = vst.msk [vmem:[%s380 + $0x30] sm:$0xf] %vm1192, %v1140
        %1206 = vst.msk [vmem:[%s380 + $0x34] sm:$0xf] %vm1192, %v1141
        %1207 = vst.msk [vmem:[%s380 + $0x38] sm:$0xf] %vm1192, %v1142
        %1208 = vst.msk [vmem:[%s380 + $0x3c] sm:$0xf] %vm1192, %v1143
        %1209 = vst.msk [vmem:[%s380 + $0x40] sm:$0xf] %vm1192, %v1144
        %1210 = vst.msk [vmem:[%s380 + $0x44] sm:$0xf] %vm1192, %v1145
        %1211 = vst.msk [vmem:[%s380 + $0x48] sm:$0xf] %vm1192, %v1146
        %1212 = vst.msk [vmem:[%s380 + $0x4c] sm:$0xf] %vm1192, %v1147
        %1213 = vst.msk [vmem:[%s380 + $0x50] sm:$0xf] %vm1192, %v1148
        %1214 = vst.msk [vmem:[%s380 + $0x54] sm:$0xf] %vm1192, %v1149
        %1215 = vst.msk [vmem:[%s380 + $0x58] sm:$0xf] %vm1192, %v1150
        %1216 = vst.msk [vmem:[%s380 + $0x5c] sm:$0xf] %vm1192, %v1151
        %1217 = vst.msk [vmem:[%s380 + $0x60] sm:$0xf] %vm1192, %v1152
        %1218 = vst.msk [vmem:[%s380 + $0x64] sm:$0xf] %vm1192, %v1153
        %1219 = vst.msk [vmem:[%s380 + $0x68] sm:$0xf] %vm1192, %v1154
        %1220 = vst.msk [vmem:[%s380 + $0x6c] sm:$0xf] %vm1192, %v1155
        %1221 = vst.msk [vmem:[%s380 + $0x70] sm:$0xf] %vm1192, %v1156
        %1222 = vst.msk [vmem:[%s380 + $0x74] sm:$0xf] %vm1192, %v1157
        %1223 = vst.msk [vmem:[%s380 + $0x78] sm:$0xf] %vm1192, %v1158
        %1224 = vst.msk [vmem:[%s380 + $0x7c] sm:$0xf] %vm1192, %v1159
      $region52: #{stem_fn.1} parent=43 // pred_fallthru
        _
      %s1225 = smul.u32 32, %s22
      %p1226 = scmp.lt.s32.totalorder %s1225, 1023
      %s1227 = scalar_select %p1226, %s1225, 1023
      %p1228 = scmp.lt.s32.totalorder %s23, 0
      %s1229 = scalar_select %p1228, %s23, 0
      %s1230 = sadd.s32 %s1229, %s1227
      %s1231 = smul.addr %s1230, 4
      %s1232 = scalar_lea.vmem %s6, %s1231
      // Predicated region
      $region53: #{stem_fn.1} parent=43 // pred_check
        %p1233 = pneg %p216
      $region54: #{stem_fn.1} parent=43 // pred_check_branch
        %1235 = sbr.rel (%p1233) target = $region56
      $region55: #{stem_fn.1} parent=43 // pred_region
        %s1236 = smul.u32 32, %s22
      $region56: #{stem_fn.1} parent=43 // pred_fallthru
        _
    $region44: #{stem_fn.1} parent=5 // pred_fallthru
      _
    %p1237 = scmp.le.s32.totalorder 2, %s12
    // Predicated region
    $region57: #{stem_fn.1} parent=5 // pred_check
      %p1238 = pneg %p1237
    $region58: #{stem_fn.1} parent=5 // pred_check_branch
      %1240 = sbr.rel (%p1238) target = $region60
    $region59: #{stem_fn.1} parent=5 // pred_region
      %s1241 = ssub.s32 %s12, 2
      // Predicated region
      $region61: #{stem_fn.1} parent=59 // pred_check
        %p1242 = pneg %p222
      $region62: #{stem_fn.1} parent=59 // pred_check_branch
        %1244 = sbr.rel (%p1242) target = $region64
      $region63: #{stem_fn.1} parent=59 // pred_region
        %s1245 = smul.u32 32, %s25
        %p1246 = scmp.lt.s32.totalorder %s1245, 1023
        %s1247 = scalar_select %p1246, %s1245, 1023
        %p1248 = scmp.lt.s32.totalorder %s26, 0
        %s1249 = scalar_select %p1248, %s26, 0
        %s1250 = sadd.s32 %s1249, %s1247
        %s1251 = smul.addr %s1250, 4
        %s1252 = scalar_lea.vmem %s6, %s1251
      $region64: #{stem_fn.1} parent=59 // pred_fallthru
        _
    $region60: #{stem_fn.1} parent=5 // pred_fallthru
      _
  $region6: #{stem_fn.1} parent=0 // loop_footer
    %s16 = sadd.s32 1, %s12
  $region7: #{stem_fn.1} parent=0 // loop_footer_branch
    %11 = sbr.rel target = $region3
  $region8: #{stem_fn.1} parent=0 // loop_exit
    _

</llo_original>
